<compile_context>
chip_gen: v7x
topology: tpu7x:2x2x1
jax: 0.10.0
libtpu: 0.0.40
codegen_flags: <defaults>
</compile_context>

<pallas_src>
import functools

import jax
import jax.numpy as jnp
import numpy as np
from jax.experimental import pallas as pl
from jax.experimental.pallas import tpu as pltpu


# -----------------------------------------------------------------------------
# Pallas kernel: one grid step == one batch element.
# -----------------------------------------------------------------------------
def _attn_subsample_kernel(
    x_ref, xs_ref, pos_ref, pos_sub_ref,
    wk_ref, bk_ref, wv_ref, bv_ref, wq_ref, bq_ref, wp_ref, bp_ref,
    out_ref, cls_ref,
    q3_ref, k3_ref, v3_ref,
    *, num_heads, key_dim, d, compute_dtype):
  f32 = jnp.float32
  cd = compute_dtype

  # Fused positional embedding, then cast once for the MXU.
  xk = (x_ref[...] + pos_ref[...]).astype(cd)            # (N,  C)
  xq = (xs_ref[...] + pos_sub_ref[...]).astype(cd)       # (N_, C)

  def dense(a_cd, w_ref, b_ref):
    # bf16 (or f32) inputs, f32 accumulation; bias added in f32.
    return jnp.dot(a_cd, w_ref[...].astype(cd),
                   preferred_element_type=f32) + b_ref[...].astype(f32)

  # Big, MXU-friendly projections (contraction over C).
  k2 = dense(xk, wk_ref, bk_ref)        # (N,  nh*key_dim) f32
  v2 = dense(xk, wv_ref, bv_ref)        # (N,  nh*d)       f32
  q2 = dense(xq, wq_ref, bq_ref)        # (N_, nh*key_dim) f32  (scale folded)

  # Head-split into head-major VMEM scratch: one static column slice per head,
  # written at a static leading offset (no live Python list, no concat).
  for h in range(num_heads):
    q3_ref[h] = q2[:, h * key_dim:(h + 1) * key_dim].astype(cd)
    k3_ref[h] = k2[:, h * key_dim:(h + 1) * key_dim].astype(cd)
    v3_ref[h] = v2[:, h * d:(h + 1) * d].astype(cd)

  # Head-batched attention (single batched matmul sequences on the MXU).
  s = jnp.einsum('hqc,hkc->hqk', q3_ref[...], k3_ref[...],
                 preferred_element_type=f32)              # (nh, N_, N) f32
  s = s - jnp.max(s, axis=-1, keepdims=True)
  p = jnp.exp(s)                                          # unnormalized, f32
  denom = jnp.sum(p, axis=-1, keepdims=True)              # (nh, N_, 1)
  inv = pl.reciprocal(denom, approx=True)                 # EUP, off the VALU

  # cls-attention row: mean over heads of the normalized row 0.  The full row
  # is written; column 0 is dropped in the wrapper (keeps in-kernel slices
  # lane-aligned).
  cls = jnp.sum(p[:, 0:1, :] * inv[:, 0:1, :], axis=0) * (1.0 / num_heads)
  cls_ref[...] = cls.astype(cls_ref.dtype)                # (1, N)

  # PV with deferred normalization: divide/multiply on (N_, d), not (N_, N).
  o = jnp.einsum('hqk,hkd->hqd', p.astype(cd), v3_ref[...],
                 preferred_element_type=f32)              # (nh, N_, d) f32
  o = o * inv
  # Hardswish kept in f32 (v5e has no bf16 VPU/EUP).
  o = o * jnp.clip(o + 3.0, 0.0, 6.0) * (1.0 / 6.0)

  # Per-head partial projections, summed over heads
  # (== hardswish(concat(heads)) @ W_p, without the concat relayout).
  po = jnp.einsum('hqd,hdo->hqo', o.astype(cd), wp_ref[...].astype(cd),
                  preferred_element_type=f32)             # (nh, N_, out)
  out = jnp.sum(po, axis=0) + bp_ref[...].astype(f32)     # (N_, out)
  out_ref[...] = out.astype(out_ref.dtype)


def _core_pallas(x, x_sub, poss, poss_sub,
                 w_k, b_k, w_v, b_v, w_q, b_q, wp3, b_p, *,
                 num_heads, key_dim, d, compute_dtype):
  B, N, C = x.shape
  n_sub = x_sub.shape[1]
  nh_kd = w_k.shape[1]
  dv = w_v.shape[1]
  out_dim = wp3.shape[2]

  kernel = functools.partial(
      _attn_subsample_kernel,
      num_heads=num_heads, key_dim=key_dim, d=d, compute_dtype=compute_dtype)

  def resident(shape):
    zeros = (0,) * len(shape)
    return pl.BlockSpec(shape, lambda b, zeros=zeros: zeros)

  out, cls = pl.pallas_call(
      kernel,
      out_shape=(
          jax.ShapeDtypeStruct((B, n_sub, out_dim), x.dtype),
          jax.ShapeDtypeStruct((B, 1, N), jnp.float32),
      ),
      grid_spec=pltpu.PrefetchScalarGridSpec(
          num_scalar_prefetch=0,
          grid=(B,),
          in_specs=[
              pl.BlockSpec((pl.Squeezed(), N, C), lambda b: (b, 0, 0)),
              pl.BlockSpec((pl.Squeezed(), n_sub, C), lambda b: (b, 0, 0)),
              resident((N, C)),                  # pos-embed (resident)
              resident((n_sub, C)),              # pos-embed, subsampled tokens
              resident((C, nh_kd)),              # W_k  (folded BN)
              resident((1, nh_kd)),              # b_k
              resident((C, dv)),                 # W_v
              resident((1, dv)),                 # b_v
              resident((C, nh_kd)),              # W_q  (scale folded in)
              resident((1, nh_kd)),              # b_q
              resident((num_heads, d, out_dim)),  # W_proj, head-major 3D
              resident((1, out_dim)),            # b_proj
          ],
          out_specs=[
              pl.BlockSpec((pl.Squeezed(), n_sub, out_dim), lambda b: (b, 0, 0)),
              pl.BlockSpec((pl.Squeezed(), 1, N), lambda b: (b, 0, 0)),
          ],
          scratch_shapes=[
              pltpu.VMEM((num_heads, n_sub, key_dim), compute_dtype),
              pltpu.VMEM((num_heads, N, key_dim), compute_dtype),
              pltpu.VMEM((num_heads, N, d), compute_dtype),
          ],
      ),
      compiler_params=pltpu.CompilerParams(
          dimension_semantics=("parallel",),
      ),
  )(x, x_sub, poss, poss_sub, w_k, b_k, w_v, b_v, w_q, b_q, wp3, b_p)
  # Drop the cls-token column of the cls row here (item: no in-kernel offset
  # slice), and the size-1 axis.
  return out, cls[:, 0, 1:]


def _core_reference(x, x_sub, poss, poss_sub,
                    w_k, b_k, w_v, b_v, w_q, b_q, wp3, b_p, *,
                    num_heads, key_dim, d, compute_dtype):
  """Plain-JAX version of the fused core (same cast points, exact division)."""
  f32 = jnp.float32
  cd = compute_dtype
  hp = jax.lax.Precision.HIGHEST
  B, N, _ = x.shape
  n_sub = x_sub.shape[1]

  xk = (x + poss[None]).astype(cd)
  xq = (x_sub + poss_sub[None]).astype(cd)

  def dense(a_cd, w, b):
    return jnp.dot(a_cd, w.astype(cd),
                   preferred_element_type=f32, precision=hp) + b

  k2 = dense(xk, w_k, b_k)
  v2 = dense(xk, w_v, b_v)
  q2 = dense(xq, w_q, b_q)
  k3 = k2.reshape(B, N, num_heads, key_dim).transpose(0, 2, 1, 3).astype(cd)
  v3 = v2.reshape(B, N, num_heads, d).transpose(0, 2, 1, 3).astype(cd)
  q3 = q2.reshape(B, n_sub, num_heads, key_dim).transpose(0, 2, 1, 3).astype(cd)

  s = jnp.einsum('bhqc,bhkc->bhqk', q3, k3,
                 preferred_element_type=f32, precision=hp)
  s = s - jnp.max(s, axis=-1, keepdims=True)
  p = jnp.exp(s)
  denom = jnp.sum(p, axis=-1, keepdims=True)                   # (B,nh,N_,1)
  cls_attn = jnp.mean(p[:, :, 0, 1:] / denom[:, :, 0, :], axis=1)  # (B, N-1)

  o = jnp.einsum('bhqk,bhkd->bhqd', p.astype(cd), v3,
                 preferred_element_type=f32, precision=hp) / denom
  o = o * jnp.clip(o + 3.0, 0.0, 6.0) * (1.0 / 6.0)
  out = jnp.einsum('bhqd,hdo->bqo', o.astype(cd), wp3.astype(cd),
                   preferred_element_type=f32, precision=hp) + b_p
  return out.astype(x.dtype), cls_attn


# -----------------------------------------------------------------------------
# Module wrapper (eval-mode AttentionSubsample.forward).
# -----------------------------------------------------------------------------
def _fold_linear_bn(w, gamma, beta, mean, var, eps=1e-5):
  """Eval-mode BatchNorm1d folded into the preceding bias-free Linear.

  `w` is stored (in_features, out_features) so the kernel computes x @ w.
  """
  s = gamma / jnp.sqrt(var + eps)
  return w * s[None, :], (beta - mean * s)[None, :]


def _subsample_indices(resolution, stride, with_cls=True):
  rows = np.arange(0, resolution, stride)
  grid = (rows[:, None] * resolution + rows[None, :]).reshape(-1)
  if with_cls:
    return np.concatenate([np.zeros((1,), np.int64), grid + 1]).astype(np.int32)
  return grid.astype(np.int32)


def attention_subsample_forward(x, global_attn, ori_indices, params, cfg, *,
                                compute_dtype=jnp.bfloat16, use_pallas=True):
  """Returns (out, new_global_attn, new_ori_indices).

  Mirrors AttentionSubsample.forward in eval mode; the two module-level
  globals it mutates are returned explicitly.
  """
  # TODO(synk): training-mode path (live BatchNorm statistics and the
  # cls-token concat copy instead of the in-place patch update) is not
  # implemented; this is the eval-mode forward with BN folded into the linears.
  if isinstance(x, tuple):
    x = x[0]

  res = cfg["resolution"]
  stride = cfg["stride"]
  num_heads = cfg["num_heads"]
  key_dim = cfg["key_dim"]
  d = int(cfg["attn_ratio"] * key_dim)
  scale = key_dim ** (-0.5)
  per_head = key_dim + d

  B, N, C = x.shape

  # ---- token-order bookkeeping (tiny data-dependent gather: plain JAX) ----
  old_scale = jnp.sum(global_attn, axis=1, keepdims=True)
  order = jnp.argsort(ori_indices, axis=1)
  x_ga_oi = jnp.concatenate(
      [x[:, 1:], global_attn[..., None], ori_indices[..., None]], axis=-1)
  x_ga_oi = jnp.take_along_axis(x_ga_oi, order[..., None], axis=1)  # easy_gather
  x_patch, ga_oi = x_ga_oi[:, :, :-2], x_ga_oi[:, :, -2:]
  ga_oi = ga_oi.reshape(B, res, res, 2)[:, ::stride, ::stride].reshape(B, -1, 2)
  global_attn_s = ga_oi[:, :, 0]
  ori_indices_new = ga_oi[:, :, 1]
  # eval-mode in-place update  x[:, 1:] = x_patch
  x = jnp.concatenate([x[:, :1], x_patch], axis=1)

  # ---- static subsample for the q branch (cls token + strided grid) ----
  sub_idx = _subsample_indices(res, stride, with_cls=True)
  poss = params["poss"].reshape(N, C)
  x_sub = x[:, sub_idx, :]
  poss_sub = poss[sub_idx, :]

  # ---- weight preparation (one-time, outside the kernel) ----
  # Split W_kv's interleaved [K(kd) | V(d)] per-head columns into W_k / W_v.
  k_cols = np.concatenate(
      [np.arange(h * per_head, h * per_head + key_dim) for h in range(num_heads)])
  v_cols = np.concatenate(
      [np.arange(h * per_head + key_dim, (h + 1) * per_head) for h in range(num_heads)])
  w_kv, b_kv = params["w_kv"], params["b_kv"]
  w_k, b_k = w_kv[:, k_cols], b_kv[:, k_cols]
  w_v, b_v = w_kv[:, v_cols], b_kv[:, v_cols]
  # Fold the attention scale into the q projection (removes the per-head
  # multiply of the (N_, N) score tile).
  w_q = params["w_q"] * scale
  b_q = params["b_q"] * scale
  # Head-major 3D projection weight for the batched per-head projection.
  out_dim = params["w_p"].shape[1]
  wp3 = params["w_p"].reshape(num_heads, d, out_dim)
  b_p = params["b_p"]

  # Resident matmul weights stored in the compute dtype (halves HBM/VMEM in
  # bf16 mode); biases stay f32 (added after the f32-accumulated dot).
  w_k = w_k.astype(compute_dtype)
  w_v = w_v.astype(compute_dtype)
  w_q = w_q.astype(compute_dtype)
  wp3 = wp3.astype(compute_dtype)

  core = _core_pallas if use_pallas else _core_reference
  out, cls_attn = core(x, x_sub, poss, poss_sub,
                       w_k, b_k, w_v, b_v, w_q, b_q, wp3, b_p,
                       num_heads=num_heads, key_dim=key_dim, d=d,
                       compute_dtype=compute_dtype)

  # ---- global-attention update (tiny scalar/vector bookkeeping) ----
  cls_attn_s = (cls_attn.reshape(B, res, res)[:, ::stride, ::stride]
                .reshape(B, -1))
  if cfg.get("learn_tradeoff_mode", True):
    tradeoff = jax.nn.sigmoid(params["learn_tradeoff"])
  else:
    tradeoff = cfg["tradeoff"]
  ga_new = (1.0 - tradeoff) * global_attn_s + tradeoff * cls_attn_s
  new_scale = jnp.sum(ga_new, axis=1, keepdims=True)
  ga_new = ga_new * (old_scale / new_scale)
  return out, ga_new, ori_indices_new


# -----------------------------------------------------------------------------
# Demo / correctness check.
# -----------------------------------------------------------------------------
if __name__ == "__main__":
  # Small shapes consistent with the module: 4x4 token grid (+cls) subsampled
  # to 2x2 (+cls); 2 heads, key_dim=16, attn_ratio=2, in_dim=32, out_dim=64.
  B = 2
  C = 32
  out_dim = 64
  key_dim = 16
  num_heads = 2
  attn_ratio = 2
  resolution, stride, resolution_ = 4, 2, 2

  N = resolution * resolution + 1
  n_patch = N - 1
  d = attn_ratio * key_dim
  dh = d * num_heads
  nh_kd = key_dim * num_heads
  hdim = dh + nh_kd

  cfg = dict(resolution=resolution, resolution_=resolution_, stride=stride,
             num_heads=num_heads, key_dim=key_dim, attn_ratio=attn_ratio,
             learn_tradeoff_mode=True, tradeoff=0.5)

  keys = list(jax.random.split(jax.random.PRNGKey(0), 16))
  nxt = iter(keys).__next__

  x = jax.random.normal(nxt(), (B, N, C), dtype=jnp.float32)
  global_attn = jax.random.uniform(nxt(), (B, n_patch), dtype=jnp.float32,
                                   minval=0.1, maxval=1.0)
  ori_indices = jnp.stack(
      [jax.random.permutation(nxt(), n_patch) for _ in range(B)]
  ).astype(jnp.float32)

  def make_linear_bn(k, fan_in, fan_out):
    k1, k2, k3, k4, k5 = jax.random.split(k, 5)
    w = jax.random.normal(k1, (fan_in, fan_out), jnp.float32) * 0.1
    gamma = jax.random.uniform(k2, (fan_out,), jnp.float32, minval=0.8, maxval=1.2)
    beta = jax.random.normal(k3, (fan_out,), jnp.float32) * 0.05
    mean = jax.random.normal(k4, (fan_out,), jnp.float32) * 0.05
    var = jax.random.uniform(k5, (fan_out,), jnp.float32, minval=0.5, maxval=1.5)
    return _fold_linear_bn(w, gamma, beta, mean, var)

  w_kv, b_kv = make_linear_bn(nxt(), C, hdim)
  w_q, b_q = make_linear_bn(nxt(), C, nh_kd)
  w_p, b_p = make_linear_bn(nxt(), dh, out_dim)
  poss = jax.random.normal(nxt(), (1, N, C), jnp.float32) * 0.02
  learn_tradeoff = jnp.float32(0.0)       # PyTorch init -> sigmoid(0) = 0.5

  params = dict(w_kv=w_kv, b_kv=b_kv, w_q=w_q, b_q=b_q, w_p=w_p, b_p=b_p,
                poss=poss, learn_tradeoff=learn_tradeoff)

  # --- f32 kernel vs plain-JAX reference (approx reciprocal -> ~1e-4 rel) ---
  out, ga_new, oi_new = attention_subsample_forward(
      x, global_attn, ori_indices, params, cfg, compute_dtype=jnp.float32)
  out = jax.block_until_ready(out)
  ref_out, ref_ga, ref_oi = attention_subsample_forward(
      x, global_attn, ori_indices, params, cfg, compute_dtype=jnp.float32,
      use_pallas=False)
  assert jnp.allclose(out, ref_out, atol=5e-3, rtol=5e-3)
  assert jnp.allclose(ga_new, ref_ga, atol=5e-3, rtol=5e-3)
  assert jnp.allclose(oi_new, ref_oi)

  # --- tuple-input path (forward accepts a tuple and uses x[0]) ---
  out_t, _, _ = attention_subsample_forward(
      (x, ga_new), global_attn, ori_indices, params, cfg,
      compute_dtype=jnp.float32)
  out_t = jax.block_until_ready(out_t)
  assert jnp.allclose(out_t, ref_out, atol=5e-3, rtol=5e-3)

  # --- default bf16 matmul inputs (f32 accumulate) vs matching reference ---
  out_bf, ga_bf, _ = attention_subsample_forward(
      x, global_attn, ori_indices, params, cfg)
  out_bf = jax.block_until_ready(out_bf)
  ref_bf, ref_ga_bf, _ = attention_subsample_forward(
      x, global_attn, ori_indices, params, cfg, use_pallas=False)
  assert jnp.allclose(out_bf, ref_bf, atol=5e-2, rtol=5e-2)
  assert jnp.allclose(ga_bf, ref_ga_bf, atol=5e-2, rtol=5e-2)

  print("KERNEL_OK")
</pallas_src>

<mosaic_0001>
module attributes {stable_mosaic.version = 11 : i64} {
  func.func @_attn_subsample_kernel(%arg0: i32, %arg1: memref<1x17x32xf32, #tpu.memory_space<vmem>>, %arg2: memref<1x5x32xf32, #tpu.memory_space<vmem>>, %arg3: memref<17x32xf32, #tpu.memory_space<vmem>>, %arg4: memref<5x32xf32, #tpu.memory_space<vmem>>, %arg5: memref<32x32xf32, #tpu.memory_space<vmem>>, %arg6: memref<1x32xf32, #tpu.memory_space<vmem>>, %arg7: memref<32x64xf32, #tpu.memory_space<vmem>>, %arg8: memref<1x64xf32, #tpu.memory_space<vmem>>, %arg9: memref<32x32xf32, #tpu.memory_space<vmem>>, %arg10: memref<1x32xf32, #tpu.memory_space<vmem>>, %arg11: memref<2x32x64xf32, #tpu.memory_space<vmem>>, %arg12: memref<1x64xf32, #tpu.memory_space<vmem>>, %arg13: memref<1x5x64xf32, #tpu.memory_space<vmem>>, %arg14: memref<1x1x17xf32, #tpu.memory_space<vmem>>, %arg15: memref<2x5x16xf32, #tpu.memory_space<vmem>>, %arg16: memref<2x17x16xf32, #tpu.memory_space<vmem>>, %arg17: memref<2x17x32xf32, #tpu.memory_space<vmem>>) attributes {dimension_semantics = [#tpu.dimension_semantics<parallel>], iteration_bounds = array<i64: 2>, scalar_prefetch = 0 : i64, scratch_operands = 3 : i64, tpu.core_type = #tpu.core_type<tc>, window_params = [{transform_indices = @transform_0, window_bounds = array<i64: 1, 17, 32>}, {transform_indices = @transform_1, window_bounds = array<i64: 1, 5, 32>}, {pipeline_mode = #tpu.pipeline_mode<synchronous>, transform_indices = @transform_2, window_bounds = array<i64: 17, 32>}, {pipeline_mode = #tpu.pipeline_mode<synchronous>, transform_indices = @transform_3, window_bounds = array<i64: 5, 32>}, {pipeline_mode = #tpu.pipeline_mode<synchronous>, transform_indices = @transform_4, window_bounds = array<i64: 32, 32>}, {pipeline_mode = #tpu.pipeline_mode<synchronous>, transform_indices = @transform_5, window_bounds = array<i64: 1, 32>}, {pipeline_mode = #tpu.pipeline_mode<synchronous>, transform_indices = @transform_6, window_bounds = array<i64: 32, 64>}, {pipeline_mode = #tpu.pipeline_mode<synchronous>, transform_indices = @transform_7, window_bounds = array<i64: 1, 64>}, {pipeline_mode = #tpu.pipeline_mode<synchronous>, transform_indices = @transform_8, window_bounds = array<i64: 32, 32>}, {pipeline_mode = #tpu.pipeline_mode<synchronous>, transform_indices = @transform_9, window_bounds = array<i64: 1, 32>}, {pipeline_mode = #tpu.pipeline_mode<synchronous>, transform_indices = @transform_10, window_bounds = array<i64: 2, 32, 64>}, {pipeline_mode = #tpu.pipeline_mode<synchronous>, transform_indices = @transform_11, window_bounds = array<i64: 1, 64>}, {transform_indices = @transform_12, window_bounds = array<i64: 1, 5, 64>}, {transform_indices = @transform_13, window_bounds = array<i64: 1, 1, 17>}]} {
    %c0 = arith.constant 0 : index
    %c0_0 = arith.constant 0 : index
    %c0_1 = arith.constant 0 : index
    %0 = vector.load %arg1[%c0, %c0_0, %c0_1] : memref<1x17x32xf32, #tpu.memory_space<vmem>>, vector<1x17x32xf32>
    %1 = vector.shape_cast %0 : vector<1x17x32xf32> to vector<17x32xf32>
    %c0_2 = arith.constant 0 : index
    %c0_3 = arith.constant 0 : index
    %2 = vector.load %arg3[%c0_2, %c0_3] : memref<17x32xf32, #tpu.memory_space<vmem>>, vector<17x32xf32>
    %3 = arith.addf %1, %2 : vector<17x32xf32>
    %c0_4 = arith.constant 0 : index
    %c0_5 = arith.constant 0 : index
    %c0_6 = arith.constant 0 : index
    %4 = vector.load %arg2[%c0_4, %c0_5, %c0_6] : memref<1x5x32xf32, #tpu.memory_space<vmem>>, vector<1x5x32xf32>
    %5 = vector.shape_cast %4 : vector<1x5x32xf32> to vector<5x32xf32>
    %c0_7 = arith.constant 0 : index
    %c0_8 = arith.constant 0 : index
    %6 = vector.load %arg4[%c0_7, %c0_8] : memref<5x32xf32, #tpu.memory_space<vmem>>, vector<5x32xf32>
    %7 = arith.addf %5, %6 : vector<5x32xf32>
    %c0_9 = arith.constant 0 : index
    %c0_10 = arith.constant 0 : index
    %8 = vector.load %arg5[%c0_9, %c0_10] : memref<32x32xf32, #tpu.memory_space<vmem>>, vector<32x32xf32>
    %cst = arith.constant dense<0.000000e+00> : vector<17x32xf32>
    %9 = tpu.matmul %3, %8, %cst {dimension_numbers = #tpu.dot_dimension_numbers<[1], [0], [0], [1], [0, 0, 1, 1], [], []>} : vector<17x32xf32>, vector<32x32xf32>, vector<17x32xf32> -> vector<17x32xf32>
    %c0_11 = arith.constant 0 : index
    %c0_12 = arith.constant 0 : index
    %10 = vector.load %arg6[%c0_11, %c0_12] : memref<1x32xf32, #tpu.memory_space<vmem>>, vector<1x32xf32>
    %11 = vector.broadcast %10 : vector<1x32xf32> to vector<17x32xf32>
    %12 = arith.addf %9, %11 : vector<17x32xf32>
    %c0_13 = arith.constant 0 : index
    %c0_14 = arith.constant 0 : index
    %13 = vector.load %arg7[%c0_13, %c0_14] : memref<32x64xf32, #tpu.memory_space<vmem>>, vector<32x64xf32>
    %cst_15 = arith.constant dense<0.000000e+00> : vector<17x64xf32>
    %14 = tpu.matmul %3, %13, %cst_15 {dimension_numbers = #tpu.dot_dimension_numbers<[1], [0], [0], [1], [0, 0, 1, 1], [], []>} : vector<17x32xf32>, vector<32x64xf32>, vector<17x64xf32> -> vector<17x64xf32>
    %c0_16 = arith.constant 0 : index
    %c0_17 = arith.constant 0 : index
    %15 = vector.load %arg8[%c0_16, %c0_17] : memref<1x64xf32, #tpu.memory_space<vmem>>, vector<1x64xf32>
    %16 = vector.broadcast %15 : vector<1x64xf32> to vector<17x64xf32>
    %17 = arith.addf %14, %16 : vector<17x64xf32>
    %c0_18 = arith.constant 0 : index
    %c0_19 = arith.constant 0 : index
    %18 = vector.load %arg9[%c0_18, %c0_19] : memref<32x32xf32, #tpu.memory_space<vmem>>, vector<32x32xf32>
    %cst_20 = arith.constant dense<0.000000e+00> : vector<5x32xf32>
    %19 = tpu.matmul %7, %18, %cst_20 {dimension_numbers = #tpu.dot_dimension_numbers<[1], [0], [0], [1], [0, 0, 1, 1], [], []>} : vector<5x32xf32>, vector<32x32xf32>, vector<5x32xf32> -> vector<5x32xf32>
    %c0_21 = arith.constant 0 : index
    %c0_22 = arith.constant 0 : index
    %20 = vector.load %arg10[%c0_21, %c0_22] : memref<1x32xf32, #tpu.memory_space<vmem>>, vector<1x32xf32>
    %21 = vector.broadcast %20 : vector<1x32xf32> to vector<5x32xf32>
    %22 = arith.addf %19, %21 : vector<5x32xf32>
    %23 = vector.extract_strided_slice %22 {offsets = [0, 0], sizes = [5, 16], strides = [1, 1]} : vector<5x32xf32> to vector<5x16xf32>
    %c0_23 = arith.constant 0 : index
    %c0_24 = arith.constant 0 : index
    %c0_25 = arith.constant 0 : index
    %24 = vector.load %arg15[%c0_23, %c0_24, %c0_25] : memref<2x5x16xf32, #tpu.memory_space<vmem>>, vector<1x5x16xf32>
    %25 = vector.shape_cast %24 : vector<1x5x16xf32> to vector<5x16xf32>
    %26 = vector.shape_cast %23 : vector<5x16xf32> to vector<1x5x16xf32>
    tpu.vector_store %arg15[%c0_23, %c0_24, %c0_25], %26 {strides = array<i32>} : memref<2x5x16xf32, #tpu.memory_space<vmem>>, vector<1x5x16xf32>,
    %27 = vector.extract_strided_slice %12 {offsets = [0, 0], sizes = [17, 16], strides = [1, 1]} : vector<17x32xf32> to vector<17x16xf32>
    %c0_26 = arith.constant 0 : index
    %c0_27 = arith.constant 0 : index
    %c0_28 = arith.constant 0 : index
    %28 = vector.load %arg16[%c0_26, %c0_27, %c0_28] : memref<2x17x16xf32, #tpu.memory_space<vmem>>, vector<1x17x16xf32>
    %29 = vector.shape_cast %28 : vector<1x17x16xf32> to vector<17x16xf32>
    %30 = vector.shape_cast %27 : vector<17x16xf32> to vector<1x17x16xf32>
    tpu.vector_store %arg16[%c0_26, %c0_27, %c0_28], %30 {strides = array<i32>} : memref<2x17x16xf32, #tpu.memory_space<vmem>>, vector<1x17x16xf32>,
    %31 = vector.extract_strided_slice %17 {offsets = [0, 0], sizes = [17, 32], strides = [1, 1]} : vector<17x64xf32> to vector<17x32xf32>
    %c0_29 = arith.constant 0 : index
    %c0_30 = arith.constant 0 : index
    %c0_31 = arith.constant 0 : index
    %32 = vector.load %arg17[%c0_29, %c0_30, %c0_31] : memref<2x17x32xf32, #tpu.memory_space<vmem>>, vector<1x17x32xf32>
    %33 = vector.shape_cast %32 : vector<1x17x32xf32> to vector<17x32xf32>
    %34 = vector.shape_cast %31 : vector<17x32xf32> to vector<1x17x32xf32>
    tpu.vector_store %arg17[%c0_29, %c0_30, %c0_31], %34 {strides = array<i32>} : memref<2x17x32xf32, #tpu.memory_space<vmem>>, vector<1x17x32xf32>,
    %35 = vector.extract_strided_slice %22 {offsets = [0, 16], sizes = [5, 16], strides = [1, 1]} : vector<5x32xf32> to vector<5x16xf32>
    %c1 = arith.constant 1 : index
    %c0_32 = arith.constant 0 : index
    %c0_33 = arith.constant 0 : index
    %36 = vector.load %arg15[%c1, %c0_32, %c0_33] : memref<2x5x16xf32, #tpu.memory_space<vmem>>, vector<1x5x16xf32>
    %37 = vector.shape_cast %36 : vector<1x5x16xf32> to vector<5x16xf32>
    %38 = vector.shape_cast %35 : vector<5x16xf32> to vector<1x5x16xf32>
    tpu.vector_store %arg15[%c1, %c0_32, %c0_33], %38 {strides = array<i32>} : memref<2x5x16xf32, #tpu.memory_space<vmem>>, vector<1x5x16xf32>,
    %39 = vector.extract_strided_slice %12 {offsets = [0, 16], sizes = [17, 16], strides = [1, 1]} : vector<17x32xf32> to vector<17x16xf32>
    %c1_34 = arith.constant 1 : index
    %c0_35 = arith.constant 0 : index
    %c0_36 = arith.constant 0 : index
    %40 = vector.load %arg16[%c1_34, %c0_35, %c0_36] : memref<2x17x16xf32, #tpu.memory_space<vmem>>, vector<1x17x16xf32>
    %41 = vector.shape_cast %40 : vector<1x17x16xf32> to vector<17x16xf32>
    %42 = vector.shape_cast %39 : vector<17x16xf32> to vector<1x17x16xf32>
    tpu.vector_store %arg16[%c1_34, %c0_35, %c0_36], %42 {strides = array<i32>} : memref<2x17x16xf32, #tpu.memory_space<vmem>>, vector<1x17x16xf32>,
    %43 = vector.extract_strided_slice %17 {offsets = [0, 32], sizes = [17, 32], strides = [1, 1]} : vector<17x64xf32> to vector<17x32xf32>
    %c1_37 = arith.constant 1 : index
    %c0_38 = arith.constant 0 : index
    %c0_39 = arith.constant 0 : index
    %44 = vector.load %arg17[%c1_37, %c0_38, %c0_39] : memref<2x17x32xf32, #tpu.memory_space<vmem>>, vector<1x17x32xf32>
    %45 = vector.shape_cast %44 : vector<1x17x32xf32> to vector<17x32xf32>
    %46 = vector.shape_cast %43 : vector<17x32xf32> to vector<1x17x32xf32>
    tpu.vector_store %arg17[%c1_37, %c0_38, %c0_39], %46 {strides = array<i32>} : memref<2x17x32xf32, #tpu.memory_space<vmem>>, vector<1x17x32xf32>,
    %c0_40 = arith.constant 0 : index
    %c0_41 = arith.constant 0 : index
    %c0_42 = arith.constant 0 : index
    %47 = vector.load %arg15[%c0_40, %c0_41, %c0_42] : memref<2x5x16xf32, #tpu.memory_space<vmem>>, vector<2x5x16xf32>
    %c0_43 = arith.constant 0 : index
    %c0_44 = arith.constant 0 : index
    %c0_45 = arith.constant 0 : index
    %48 = vector.load %arg16[%c0_43, %c0_44, %c0_45] : memref<2x17x16xf32, #tpu.memory_space<vmem>>, vector<2x17x16xf32>
    "tpu.trace_start"() <{level = 10 : i32, message = "hqc,hkc->hqk"}> : () -> ()
    %cst_46 = arith.constant dense<0.000000e+00> : vector<2x5x17xf32>
    %49 = tpu.matmul %47, %48, %cst_46 {dimension_numbers = #tpu.dot_dimension_numbers<[2], [2], [1], [1], [0, 0, 0, 1, 1, 1], [0], [0]>} : vector<2x5x16xf32>, vector<2x17x16xf32>, vector<2x5x17xf32> -> vector<2x5x17xf32>
    "tpu.trace_stop"() : () -> ()
    %cst_47 = arith.constant dense<0xFF800000> : vector<2x5xf32>
    %50 = vector.multi_reduction <maximumf>, %49, %cst_47 [2] : vector<2x5x17xf32> to vector<2x5xf32>
    %51 = vector.shape_cast %50 : vector<2x5xf32> to vector<2x5x1xf32>
    %52 = vector.broadcast %51 : vector<2x5x1xf32> to vector<2x5x17xf32>
    %53 = arith.subf %49, %52 : vector<2x5x17xf32>
    %54 = math.exp %53 : vector<2x5x17xf32>
    %cst_48 = arith.constant dense<0.000000e+00> : vector<2x5xf32>
    %55 = vector.multi_reduction <add>, %54, %cst_48 [2] : vector<2x5x17xf32> to vector<2x5xf32>
    %56 = vector.shape_cast %55 : vector<2x5xf32> to vector<2x5x1xf32>
    %57 = tpu.reciprocal %56 {approx = true} : vector<2x5x1xf32> -> vector<2x5x1xf32>
    %58 = vector.extract_strided_slice %54 {offsets = [0, 0, 0], sizes = [2, 1, 17], strides = [1, 1, 1]} : vector<2x5x17xf32> to vector<2x1x17xf32>
    %59 = vector.extract_strided_slice %57 {offsets = [0, 0, 0], sizes = [2, 1, 1], strides = [1, 1, 1]} : vector<2x5x1xf32> to vector<2x1x1xf32>
    %60 = vector.broadcast %59 : vector<2x1x1xf32> to vector<2x1x17xf32>
    %61 = arith.mulf %58, %60 : vector<2x1x17xf32>
    %cst_49 = arith.constant dense<0.000000e+00> : vector<1x17xf32>
    %62 = vector.multi_reduction <add>, %61, %cst_49 [0] : vector<2x1x17xf32> to vector<1x17xf32>
    %cst_50 = arith.constant 5.000000e-01 : f32
    %63 = vector.broadcast %cst_50 : f32 to vector<1x17xf32>
    %64 = arith.mulf %62, %63 : vector<1x17xf32>
    %c0_51 = arith.constant 0 : index
    %c0_52 = arith.constant 0 : index
    %c0_53 = arith.constant 0 : index
    %65 = vector.load %arg14[%c0_51, %c0_52, %c0_53] : memref<1x1x17xf32, #tpu.memory_space<vmem>>, vector<1x1x17xf32>
    %66 = vector.shape_cast %65 : vector<1x1x17xf32> to vector<1x17xf32>
    %67 = vector.shape_cast %64 : vector<1x17xf32> to vector<1x1x17xf32>
    tpu.vector_store %arg14[%c0_51, %c0_52, %c0_53], %67 {strides = array<i32>} : memref<1x1x17xf32, #tpu.memory_space<vmem>>, vector<1x1x17xf32>,
    %c0_54 = arith.constant 0 : index
    %c0_55 = arith.constant 0 : index
    %c0_56 = arith.constant 0 : index
    %68 = vector.load %arg17[%c0_54, %c0_55, %c0_56] : memref<2x17x32xf32, #tpu.memory_space<vmem>>, vector<2x17x32xf32>
    "tpu.trace_start"() <{level = 10 : i32, message = "hqk,hkd->hqd"}> : () -> ()
    %cst_57 = arith.constant dense<0.000000e+00> : vector<2x5x32xf32>
    %69 = tpu.matmul %54, %68, %cst_57 {dimension_numbers = #tpu.dot_dimension_numbers<[2], [1], [1], [2], [0, 0, 0, 1, 1, 2], [0], [0]>} : vector<2x5x17xf32>, vector<2x17x32xf32>, vector<2x5x32xf32> -> vector<2x5x32xf32>
    "tpu.trace_stop"() : () -> ()
    %70 = vector.broadcast %57 : vector<2x5x1xf32> to vector<2x5x32xf32>
    %71 = arith.mulf %69, %70 : vector<2x5x32xf32>
    %cst_58 = arith.constant 3.000000e+00 : f32
    %72 = vector.broadcast %cst_58 : f32 to vector<2x5x32xf32>
    %73 = arith.addf %71, %72 : vector<2x5x32xf32>
    %cst_59 = arith.constant 0.000000e+00 : f32
    %cst_60 = arith.constant 6.000000e+00 : f32
    %74 = vector.broadcast %cst_59 : f32 to vector<2x5x32xf32>
    %75 = arith.maximumf %74, %73 : vector<2x5x32xf32>
    %76 = vector.broadcast %cst_60 : f32 to vector<2x5x32xf32>
    %77 = arith.minimumf %76, %75 : vector<2x5x32xf32>
    %78 = arith.mulf %71, %77 : vector<2x5x32xf32>
    %cst_61 = arith.constant 0.166666672 : f32
    %79 = vector.broadcast %cst_61 : f32 to vector<2x5x32xf32>
    %80 = arith.mulf %78, %79 : vector<2x5x32xf32>
    %c0_62 = arith.constant 0 : index
    %c0_63 = arith.constant 0 : index
    %c0_64 = arith.constant 0 : index
    %81 = vector.load %arg11[%c0_62, %c0_63, %c0_64] : memref<2x32x64xf32, #tpu.memory_space<vmem>>, vector<2x32x64xf32>
    "tpu.trace_start"() <{level = 10 : i32, message = "hqd,hdo->hqo"}> : () -> ()
    %cst_65 = arith.constant dense<0.000000e+00> : vector<2x5x64xf32>
    %82 = tpu.matmul %80, %81, %cst_65 {dimension_numbers = #tpu.dot_dimension_numbers<[2], [1], [1], [2], [0, 0, 0, 1, 1, 2], [0], [0]>} : vector<2x5x32xf32>, vector<2x32x64xf32>, vector<2x5x64xf32> -> vector<2x5x64xf32>
    "tpu.trace_stop"() : () -> ()
    %cst_66 = arith.constant dense<0.000000e+00> : vector<5x64xf32>
    %83 = vector.multi_reduction <add>, %82, %cst_66 [0] : vector<2x5x64xf32> to vector<5x64xf32>
    %c0_67 = arith.constant 0 : index
    %c0_68 = arith.constant 0 : index
    %84 = vector.load %arg12[%c0_67, %c0_68] : memref<1x64xf32, #tpu.memory_space<vmem>>, vector<1x64xf32>
    %85 = vector.broadcast %84 : vector<1x64xf32> to vector<5x64xf32>
    %86 = arith.addf %83, %85 : vector<5x64xf32>
    %c0_69 = arith.constant 0 : index
    %c0_70 = arith.constant 0 : index
    %c0_71 = arith.constant 0 : index
    %87 = vector.load %arg13[%c0_69, %c0_70, %c0_71] : memref<1x5x64xf32, #tpu.memory_space<vmem>>, vector<1x5x64xf32>
    %88 = vector.shape_cast %87 : vector<1x5x64xf32> to vector<5x64xf32>
    %89 = vector.shape_cast %86 : vector<5x64xf32> to vector<1x5x64xf32>
    tpu.vector_store %arg13[%c0_69, %c0_70, %c0_71], %89 {strides = array<i32>} : memref<1x5x64xf32, #tpu.memory_space<vmem>>, vector<1x5x64xf32>,
    return
  }
  func.func @transform_0(%arg0: i32) -> (i32, i32, i32) {
    %c0_i32 = arith.constant 0 : i32
    %c0_i32_0 = arith.constant 0 : i32
    %c0_i32_1 = arith.constant 0 : i32
    return %arg0, %c0_i32, %c0_i32_0 : i32, i32, i32
  }
  func.func @transform_1(%arg0: i32) -> (i32, i32, i32) {
    %c0_i32 = arith.constant 0 : i32
    %c0_i32_0 = arith.constant 0 : i32
    %c0_i32_1 = arith.constant 0 : i32
    return %arg0, %c0_i32, %c0_i32_0 : i32, i32, i32
  }
  func.func @transform_2(%arg0: i32) -> (i32, i32) {
    %c0_i32 = arith.constant 0 : i32
    %c0_i32_0 = arith.constant 0 : i32
    %c0_i32_1 = arith.constant 0 : i32
    return %c0_i32, %c0_i32_0 : i32, i32
  }
  func.func @transform_3(%arg0: i32) -> (i32, i32) {
    %c0_i32 = arith.constant 0 : i32
    %c0_i32_0 = arith.constant 0 : i32
    %c0_i32_1 = arith.constant 0 : i32
    return %c0_i32, %c0_i32_0 : i32, i32
  }
  func.func @transform_4(%arg0: i32) -> (i32, i32) {
    %c0_i32 = arith.constant 0 : i32
    %c0_i32_0 = arith.constant 0 : i32
    %c0_i32_1 = arith.constant 0 : i32
    return %c0_i32, %c0_i32_0 : i32, i32
  }
  func.func @transform_5(%arg0: i32) -> (i32, i32) {
    %c0_i32 = arith.constant 0 : i32
    %c0_i32_0 = arith.constant 0 : i32
    %c0_i32_1 = arith.constant 0 : i32
    return %c0_i32, %c0_i32_0 : i32, i32
  }
  func.func @transform_6(%arg0: i32) -> (i32, i32) {
    %c0_i32 = arith.constant 0 : i32
    %c0_i32_0 = arith.constant 0 : i32
    %c0_i32_1 = arith.constant 0 : i32
    return %c0_i32, %c0_i32_0 : i32, i32
  }
  func.func @transform_7(%arg0: i32) -> (i32, i32) {
    %c0_i32 = arith.constant 0 : i32
    %c0_i32_0 = arith.constant 0 : i32
    %c0_i32_1 = arith.constant 0 : i32
    return %c0_i32, %c0_i32_0 : i32, i32
  }
  func.func @transform_8(%arg0: i32) -> (i32, i32) {
    %c0_i32 = arith.constant 0 : i32
    %c0_i32_0 = arith.constant 0 : i32
    %c0_i32_1 = arith.constant 0 : i32
    return %c0_i32, %c0_i32_0 : i32, i32
  }
  func.func @transform_9(%arg0: i32) -> (i32, i32) {
    %c0_i32 = arith.constant 0 : i32
    %c0_i32_0 = arith.constant 0 : i32
    %c0_i32_1 = arith.constant 0 : i32
    return %c0_i32, %c0_i32_0 : i32, i32
  }
  func.func @transform_10(%arg0: i32) -> (i32, i32, i32) {
    %c0_i32 = arith.constant 0 : i32
    %c0_i32_0 = arith.constant 0 : i32
    %c0_i32_1 = arith.constant 0 : i32
    %c0_i32_2 = arith.constant 0 : i32
    return %c0_i32, %c0_i32_0, %c0_i32_1 : i32, i32, i32
  }
  func.func @transform_11(%arg0: i32) -> (i32, i32) {
    %c0_i32 = arith.constant 0 : i32
    %c0_i32_0 = arith.constant 0 : i32
    %c0_i32_1 = arith.constant 0 : i32
    return %c0_i32, %c0_i32_0 : i32, i32
  }
  func.func @transform_12(%arg0: i32) -> (i32, i32, i32) {
    %c0_i32 = arith.constant 0 : i32
    %c0_i32_0 = arith.constant 0 : i32
    %c0_i32_1 = arith.constant 0 : i32
    return %arg0, %c0_i32, %c0_i32_0 : i32, i32, i32
  }
  func.func @transform_13(%arg0: i32) -> (i32, i32, i32) {
    %c0_i32 = arith.constant 0 : i32
    %c0_i32_0 = arith.constant 0 : i32
    %c0_i32_1 = arith.constant 0 : i32
    return %arg0, %c0_i32, %c0_i32_0 : i32, i32, i32
  }
}

</mosaic_0001>

<llo_original>
// kernel: tpu_custom_call.1
$region0: #{tpu_custom_call.1}
  #allocation0 [shape = 'u32[]', space=smem, size = 0x4, offset = 0x4, fixed_abs, tag = 'smem constant byte address 0x4 - core index']
  #allocation1 [shape = 'u32[144,128]{1,0:T(1,128)}', space=vmem, size = 0x12000, scoped, tag = 'internal scratch']
  #allocation2 [shape = 'f32[2,5,16]{2,1,0:T(8,128)}', space=vmem, size = 0x2000, scoped, tag = 'scratch operand']
  #allocation3 [shape = 'f32[2,17,16]{2,1,0:T(8,128)}', space=vmem, size = 0x6000, scoped, tag = 'scratch operand']
  #allocation4 [shape = 'f32[2,17,32]{2,1,0:T(8,128)}', space=vmem, size = 0x6000, scoped, tag = 'scratch operand']
  %s0 = inlined_call_operand.vmem [shape: f32[2,17,32], index: 0, kind: input, shape index: {}]
  %s1 = inlined_call_operand.vmem [shape: f32[2,5,32], index: 1, kind: input, shape index: {}]
  %s2 = inlined_call_operand.hbm [shape: f32[17,32], index: 2, kind: input, shape index: {}]
  %s3 = inlined_call_operand.hbm [shape: f32[5,32], index: 3, kind: input, shape index: {}]
  %s4 = inlined_call_operand.vmem [shape: f32[32,32], index: 4, kind: input, shape index: {}]
  %s5 = inlined_call_operand.vmem [shape: f32[1,32], index: 5, kind: input, shape index: {}]
  %s6 = inlined_call_operand.vmem [shape: f32[32,64], index: 6, kind: input, shape index: {}]
  %s7 = inlined_call_operand.vmem [shape: f32[1,64], index: 7, kind: input, shape index: {}]
  %s8 = inlined_call_operand.hbm [shape: f32[32,32], index: 8, kind: input, shape index: {}]
  %s9 = inlined_call_operand.vmem [shape: f32[1,32], index: 9, kind: input, shape index: {}]
  %s10 = inlined_call_operand.vmem [shape: f32[2,32,64], index: 10, kind: input, shape index: {}]
  %s11 = inlined_call_operand.vmem [shape: f32[1,64], index: 11, kind: input, shape index: {}]
  %s12 = inlined_call_operand.vmem [shape: f32[2,5,64], index: 12, kind: output, shape index: {0}]
  %s13 = inlined_call_operand.hbm [shape: f32[2,1,17], index: 13, kind: output, shape index: {1}]
  %14 = xla_tuple %s12, %s13
  %s15 = sld [smem:[#allocation0]]
  $region101: #{tpu_custom_call.1} parent=0
    _
  %s17 = ssub.s32 1, %s15
  %s18 = scalar_select 0, %s17, %s15
  $region1: #{tpu_custom_call.1} parent=0
    #allocation5 [shape = 'u8[12288]{0}', space=vmem, size = 0x3000, scoped, tag = 'input window, operand 2, single buffered']
    #allocation6 [shape = 's32[2]{0}', space=sflag, size = 0x8, scoped, tag = 'scoped memory for tpu_custom_call.1']
    #allocation7 [shape = 's32[2]{0}', space=sflag, size = 0x8, scoped, tag = 'scoped memory for tpu_custom_call.1']
    #allocation8 [shape = 'u8[4096]{0}', space=vmem, size = 0x1000, scoped, tag = 'input window, operand 3, single buffered']
    #allocation9 [shape = 's32[1]{0}', space=sflag, size = 0x4, scoped, tag = 'scoped memory for tpu_custom_call.1']
    #allocation10 [shape = 'u8[16384]{0}', space=vmem, size = 0x4000, scoped, tag = 'input window, operand 8, single buffered']
    #allocation11 [shape = 'u8[1024]{0}', space=vmem, size = 0x400, scoped, tag = 'output window, operand 1']
    %19 = vsyncpa [#allocation6], 0
    %20 = vsyncpa [#allocation9], 0
    %21 = vsyncpa [#allocation7], 0
    %s22 = scalar_lea.sflag [#allocation7], 1
    %23 = vsyncpa %s22, 0
    loop: start=0, step=1, limit=4
    $region2: #{tpu_custom_call.1} parent=1 // loop_pre_header
      _
    $region3: #{tpu_custom_call.1} parent=1 // loop_header
      %s25 = sphi 0, %s29
      %p26 = scmp.ge.s32.totalorder %s25, 4
      %s35 = sphi 0, %s37
      %s38 = sphi 0, %s35
      %s39 = sphi 0, %s38
      %s55 = sphi 0, %s39
      %s61 = sphi 0, %s63
      %s64 = sphi 0, %s61
      %s65 = sphi 0, %s64
      %s81 = sphi 0, %s65
      %s85 = sphi 0, %s85
      %s87 = sphi 0, %s85
      %s88 = sphi 0, %s87
      %s102 = sphi 0, %s88
      %s106 = sphi 0, %s106
      %s108 = sphi 0, %s106
      %s109 = sphi 0, %s108
      %s123 = sphi 0, %s109
      %s127 = sphi 0, %s127
      %s129 = sphi 0, %s127
      %s130 = sphi 0, %s129
      %s144 = sphi 0, %s130
      %s148 = sphi 0, %s148
      %s150 = sphi 0, %s148
      %s151 = sphi 0, %s150
      %s165 = sphi 0, %s151
      %s169 = sphi 0, %s169
      %s171 = sphi 0, %s169
      %s172 = sphi 0, %s171
      %s186 = sphi 0, %s172
      %s190 = sphi 0, %s190
      %s192 = sphi 0, %s190
      %s193 = sphi 0, %s192
      %s207 = sphi 0, %s193
      %s211 = sphi 0, %s211
      %s213 = sphi 0, %s211
      %s214 = sphi 0, %s213
      %s228 = sphi 0, %s214
      %s232 = sphi 0, %s232
      %s234 = sphi 0, %s232
      %s235 = sphi 0, %s234
      %s249 = sphi 0, %s235
      %s253 = sphi 0, %s253
      %s255 = sphi 0, %s253
      %s256 = sphi 0, %s255
      %s270 = sphi 0, %s256
      %s274 = sphi 0, %s274
      %s276 = sphi 0, %s274
      %s277 = sphi 0, %s276
      %s291 = sphi 0, %s277
      %s297 = sphi 0, %s299
      %s300 = sphi 0, %s297
      %s301 = sphi 0, %s300
      %s317 = sphi 0, %s301
      %s323 = sphi 0, %s325
      %s326 = sphi 0, %s323
      %s327 = sphi 0, %s326
      %s343 = sphi 0, %s327
    $region4: #{tpu_custom_call.1} parent=1 // loop_header_branch
      %28 = sbr.rel (%p26) target = $region8
    $region5: #{tpu_custom_call.1} parent=1 // loop_body
      %s30 = ssub.s32 %s25, 1
      %s31 = ssub.s32 %s25, 2
      %s32 = sadd.s32 %s25, 1
      %s33 = ssub.s32 %s25, %s32
      %p34 = scmp.eq.s32.totalorder %s33, 0
      %s36 = sadd.s32 %s35, 1
      %s37 = scalar_select %p34, %s35, %s36
      %p40 = pneg %p34
      %p41 = scmp.eq.s32.totalorder %s25, 1
      %p42 = por %p40, %p41
      %p43 = scmp.ne.s32.totalorder %s35, %s38
      %p44 = scmp.eq.s32.totalorder %s25, 0
      %p45 = por %p43, %p44
      %p46 = scmp.ne.s32.totalorder %s35, %s38
      %p47 = scmp.eq.s32.totalorder %s30, 1
      %p48 = por %p46, %p47
      %p49 = scmp.ne.s32.totalorder %s38, %s39
      %p50 = scmp.eq.s32.totalorder %s30, 0
      %p51 = por %p49, %p50
      %p52 = scmp.ne.s32.totalorder %s38, %s39
      %p53 = scmp.eq.s32.totalorder %s31, 1
      %p54 = por %p52, %p53
      %p56 = scmp.ne.s32.totalorder %s39, %s55
      %p57 = scmp.eq.s32.totalorder %s31, 0
      %p58 = por %p56, %p57
      %s59 = ssub.s32 %s25, %s32
      %p60 = scmp.eq.s32.totalorder %s59, 0
      %s62 = sadd.s32 %s61, 1
      %s63 = scalar_select %p60, %s61, %s62
      %p66 = pneg %p60
      %p67 = scmp.eq.s32.totalorder %s25, 1
      %p68 = por %p66, %p67
      %p69 = scmp.ne.s32.totalorder %s61, %s64
      %p70 = scmp.eq.s32.totalorder %s25, 0
      %p71 = por %p69, %p70
      %p72 = scmp.ne.s32.totalorder %s61, %s64
      %p73 = scmp.eq.s32.totalorder %s30, 1
      %p74 = por %p72, %p73
      %p75 = scmp.ne.s32.totalorder %s64, %s65
      %p76 = scmp.eq.s32.totalorder %s30, 0
      %p77 = por %p75, %p76
      %p78 = scmp.ne.s32.totalorder %s64, %s65
      %p79 = scmp.eq.s32.totalorder %s31, 1
      %p80 = por %p78, %p79
      %p82 = scmp.ne.s32.totalorder %s65, %s81
      %p83 = scmp.eq.s32.totalorder %s31, 0
      %p84 = por %p82, %p83
      %s86 = sadd.s32 %s85, 1
      %p89 = scmp.eq.s32.totalorder %s25, 1
      %p90 = scmp.ne.s32.totalorder %s85, %s87
      %p91 = scmp.eq.s32.totalorder %s25, 0
      %p92 = por %p90, %p91
      %p93 = scmp.ne.s32.totalorder %s85, %s87
      %p94 = scmp.eq.s32.totalorder %s30, 1
      %p95 = por %p93, %p94
      %p96 = scmp.ne.s32.totalorder %s87, %s88
      %p97 = scmp.eq.s32.totalorder %s30, 0
      %p98 = por %p96, %p97
      %p99 = scmp.ne.s32.totalorder %s87, %s88
      %p100 = scmp.eq.s32.totalorder %s31, 1
      %p101 = por %p99, %p100
      %p103 = scmp.ne.s32.totalorder %s88, %s102
      %p104 = scmp.eq.s32.totalorder %s31, 0
      %p105 = por %p103, %p104
      %s107 = sadd.s32 %s106, 1
      %p110 = scmp.eq.s32.totalorder %s25, 1
      %p111 = scmp.ne.s32.totalorder %s106, %s108
      %p112 = scmp.eq.s32.totalorder %s25, 0
      %p113 = por %p111, %p112
      %p114 = scmp.ne.s32.totalorder %s106, %s108
      %p115 = scmp.eq.s32.totalorder %s30, 1
      %p116 = por %p114, %p115
      %p117 = scmp.ne.s32.totalorder %s108, %s109
      %p118 = scmp.eq.s32.totalorder %s30, 0
      %p119 = por %p117, %p118
      %p120 = scmp.ne.s32.totalorder %s108, %s109
      %p121 = scmp.eq.s32.totalorder %s31, 1
      %p122 = por %p120, %p121
      %p124 = scmp.ne.s32.totalorder %s109, %s123
      %p125 = scmp.eq.s32.totalorder %s31, 0
      %p126 = por %p124, %p125
      %s128 = sadd.s32 %s127, 1
      %p131 = scmp.eq.s32.totalorder %s25, 1
      %p132 = scmp.ne.s32.totalorder %s127, %s129
      %p133 = scmp.eq.s32.totalorder %s25, 0
      %p134 = por %p132, %p133
      %p135 = scmp.ne.s32.totalorder %s127, %s129
      %p136 = scmp.eq.s32.totalorder %s30, 1
      %p137 = por %p135, %p136
      %p138 = scmp.ne.s32.totalorder %s129, %s130
      %p139 = scmp.eq.s32.totalorder %s30, 0
      %p140 = por %p138, %p139
      %p141 = scmp.ne.s32.totalorder %s129, %s130
      %p142 = scmp.eq.s32.totalorder %s31, 1
      %p143 = por %p141, %p142
      %p145 = scmp.ne.s32.totalorder %s130, %s144
      %p146 = scmp.eq.s32.totalorder %s31, 0
      %p147 = por %p145, %p146
      %s149 = sadd.s32 %s148, 1
      %p152 = scmp.eq.s32.totalorder %s25, 1
      %p153 = scmp.ne.s32.totalorder %s148, %s150
      %p154 = scmp.eq.s32.totalorder %s25, 0
      %p155 = por %p153, %p154
      %p156 = scmp.ne.s32.totalorder %s148, %s150
      %p157 = scmp.eq.s32.totalorder %s30, 1
      %p158 = por %p156, %p157
      %p159 = scmp.ne.s32.totalorder %s150, %s151
      %p160 = scmp.eq.s32.totalorder %s30, 0
      %p161 = por %p159, %p160
      %p162 = scmp.ne.s32.totalorder %s150, %s151
      %p163 = scmp.eq.s32.totalorder %s31, 1
      %p164 = por %p162, %p163
      %p166 = scmp.ne.s32.totalorder %s151, %s165
      %p167 = scmp.eq.s32.totalorder %s31, 0
      %p168 = por %p166, %p167
      %s170 = sadd.s32 %s169, 1
      %p173 = scmp.eq.s32.totalorder %s25, 1
      %p174 = scmp.ne.s32.totalorder %s169, %s171
      %p175 = scmp.eq.s32.totalorder %s25, 0
      %p176 = por %p174, %p175
      %p177 = scmp.ne.s32.totalorder %s169, %s171
      %p178 = scmp.eq.s32.totalorder %s30, 1
      %p179 = por %p177, %p178
      %p180 = scmp.ne.s32.totalorder %s171, %s172
      %p181 = scmp.eq.s32.totalorder %s30, 0
      %p182 = por %p180, %p181
      %p183 = scmp.ne.s32.totalorder %s171, %s172
      %p184 = scmp.eq.s32.totalorder %s31, 1
      %p185 = por %p183, %p184
      %p187 = scmp.ne.s32.totalorder %s172, %s186
      %p188 = scmp.eq.s32.totalorder %s31, 0
      %p189 = por %p187, %p188
      %s191 = sadd.s32 %s190, 1
      %p194 = scmp.eq.s32.totalorder %s25, 1
      %p195 = scmp.ne.s32.totalorder %s190, %s192
      %p196 = scmp.eq.s32.totalorder %s25, 0
      %p197 = por %p195, %p196
      %p198 = scmp.ne.s32.totalorder %s190, %s192
      %p199 = scmp.eq.s32.totalorder %s30, 1
      %p200 = por %p198, %p199
      %p201 = scmp.ne.s32.totalorder %s192, %s193
      %p202 = scmp.eq.s32.totalorder %s30, 0
      %p203 = por %p201, %p202
      %p204 = scmp.ne.s32.totalorder %s192, %s193
      %p205 = scmp.eq.s32.totalorder %s31, 1
      %p206 = por %p204, %p205
      %p208 = scmp.ne.s32.totalorder %s193, %s207
      %p209 = scmp.eq.s32.totalorder %s31, 0
      %p210 = por %p208, %p209
      %s212 = sadd.s32 %s211, 1
      %p215 = scmp.eq.s32.totalorder %s25, 1
      %p216 = scmp.ne.s32.totalorder %s211, %s213
      %p217 = scmp.eq.s32.totalorder %s25, 0
      %p218 = por %p216, %p217
      %p219 = scmp.ne.s32.totalorder %s211, %s213
      %p220 = scmp.eq.s32.totalorder %s30, 1
      %p221 = por %p219, %p220
      %p222 = scmp.ne.s32.totalorder %s213, %s214
      %p223 = scmp.eq.s32.totalorder %s30, 0
      %p224 = por %p222, %p223
      %p225 = scmp.ne.s32.totalorder %s213, %s214
      %p226 = scmp.eq.s32.totalorder %s31, 1
      %p227 = por %p225, %p226
      %p229 = scmp.ne.s32.totalorder %s214, %s228
      %p230 = scmp.eq.s32.totalorder %s31, 0
      %p231 = por %p229, %p230
      %s233 = sadd.s32 %s232, 1
      %p236 = scmp.eq.s32.totalorder %s25, 1
      %p237 = scmp.ne.s32.totalorder %s232, %s234
      %p238 = scmp.eq.s32.totalorder %s25, 0
      %p239 = por %p237, %p238
      %p240 = scmp.ne.s32.totalorder %s232, %s234
      %p241 = scmp.eq.s32.totalorder %s30, 1
      %p242 = por %p240, %p241
      %p243 = scmp.ne.s32.totalorder %s234, %s235
      %p244 = scmp.eq.s32.totalorder %s30, 0
      %p245 = por %p243, %p244
      %p246 = scmp.ne.s32.totalorder %s234, %s235
      %p247 = scmp.eq.s32.totalorder %s31, 1
      %p248 = por %p246, %p247
      %p250 = scmp.ne.s32.totalorder %s235, %s249
      %p251 = scmp.eq.s32.totalorder %s31, 0
      %p252 = por %p250, %p251
      %s254 = sadd.s32 %s253, 1
      %p257 = scmp.eq.s32.totalorder %s25, 1
      %p258 = scmp.ne.s32.totalorder %s253, %s255
      %p259 = scmp.eq.s32.totalorder %s25, 0
      %p260 = por %p258, %p259
      %p261 = scmp.ne.s32.totalorder %s253, %s255
      %p262 = scmp.eq.s32.totalorder %s30, 1
      %p263 = por %p261, %p262
      %p264 = scmp.ne.s32.totalorder %s255, %s256
      %p265 = scmp.eq.s32.totalorder %s30, 0
      %p266 = por %p264, %p265
      %p267 = scmp.ne.s32.totalorder %s255, %s256
      %p268 = scmp.eq.s32.totalorder %s31, 1
      %p269 = por %p267, %p268
      %p271 = scmp.ne.s32.totalorder %s256, %s270
      %p272 = scmp.eq.s32.totalorder %s31, 0
      %p273 = por %p271, %p272
      %s275 = sadd.s32 %s274, 1
      %p278 = scmp.eq.s32.totalorder %s25, 1
      %p279 = scmp.ne.s32.totalorder %s274, %s276
      %p280 = scmp.eq.s32.totalorder %s25, 0
      %p281 = por %p279, %p280
      %p282 = scmp.ne.s32.totalorder %s274, %s276
      %p283 = scmp.eq.s32.totalorder %s30, 1
      %p284 = por %p282, %p283
      %p285 = scmp.ne.s32.totalorder %s276, %s277
      %p286 = scmp.eq.s32.totalorder %s30, 0
      %p287 = por %p285, %p286
      %p288 = scmp.ne.s32.totalorder %s276, %s277
      %p289 = scmp.eq.s32.totalorder %s31, 1
      %p290 = por %p288, %p289
      %p292 = scmp.ne.s32.totalorder %s277, %s291
      %p293 = scmp.eq.s32.totalorder %s31, 0
      %p294 = por %p292, %p293
      %s295 = ssub.s32 %s25, %s32
      %p296 = scmp.eq.s32.totalorder %s295, 0
      %s298 = sadd.s32 %s297, 1
      %s299 = scalar_select %p296, %s297, %s298
      %p302 = pneg %p296
      %p303 = scmp.eq.s32.totalorder %s25, 1
      %p304 = por %p302, %p303
      %p305 = scmp.ne.s32.totalorder %s297, %s300
      %p306 = scmp.eq.s32.totalorder %s25, 0
      %p307 = por %p305, %p306
      %p308 = scmp.ne.s32.totalorder %s297, %s300
      %p309 = scmp.eq.s32.totalorder %s30, 1
      %p310 = por %p308, %p309
      %p311 = scmp.ne.s32.totalorder %s300, %s301
      %p312 = scmp.eq.s32.totalorder %s30, 0
      %p313 = por %p311, %p312
      %p314 = scmp.ne.s32.totalorder %s300, %s301
      %p315 = scmp.eq.s32.totalorder %s31, 1
      %p316 = por %p314, %p315
      %p318 = scmp.ne.s32.totalorder %s301, %s317
      %p319 = scmp.eq.s32.totalorder %s31, 0
      %p320 = por %p318, %p319
      %s321 = ssub.s32 %s25, %s32
      %p322 = scmp.eq.s32.totalorder %s321, 0
      %s324 = sadd.s32 %s323, 1
      %s325 = scalar_select %p322, %s323, %s324
      %p328 = pneg %p322
      %p329 = scmp.eq.s32.totalorder %s25, 1
      %p330 = por %p328, %p329
      %p331 = scmp.ne.s32.totalorder %s323, %s326
      %p332 = scmp.eq.s32.totalorder %s25, 0
      %p333 = por %p331, %p332
      %p334 = scmp.ne.s32.totalorder %s323, %s326
      %p335 = scmp.eq.s32.totalorder %s30, 1
      %p336 = por %p334, %p335
      %p337 = scmp.ne.s32.totalorder %s326, %s327
      %p338 = scmp.eq.s32.totalorder %s30, 0
      %p339 = por %p337, %p338
      %p340 = scmp.ne.s32.totalorder %s326, %s327
      %p341 = scmp.eq.s32.totalorder %s31, 1
      %p342 = por %p340, %p341
      %p344 = scmp.ne.s32.totalorder %s327, %s343
      %p345 = scmp.eq.s32.totalorder %s31, 0
      %p346 = por %p344, %p345
      %p347 = scmp.le.s32.totalorder 1, %s25
      %p348 = scmp.lt.s32.totalorder %s25, 3
      %p349 = pnand %p347, %p348
      %p350 = pneg %p349
      // Predicated region
      $region9: #{tpu_custom_call.1} parent=5 // pred_check
        _
      $region10: #{tpu_custom_call.1} parent=5 // pred_check_branch
        %352 = sbr.rel (%p349) target = $region12
      $region11: #{tpu_custom_call.1} parent=5 // pred_region
        %s353 = ssub.s32 %s25, 1
        // Predicated region
        $region13: #{tpu_custom_call.1} parent=11 // pred_check
          %p354 = pneg %p98
        $region14: #{tpu_custom_call.1} parent=11 // pred_check_branch
          %356 = sbr.rel (%p354) target = $region16
        $region15: #{tpu_custom_call.1} parent=11 // pred_region
          %s358 = ssub.s32 384, 384
          %359 = vsyncadd [#allocation6], %s358
          %s360 = sshll.u32 [#allocation5], 4
          %s361 = int_to_ptr.vmem [resolvable:$true] %s360
          %366 = dma.hbm_to_vmem [thread:$0]  %s2, 384, %s361, [#allocation6], 128, 128, 8
        $region16: #{tpu_custom_call.1} parent=11 // pred_fallthru
          _
        // Predicated region
        $region17: #{tpu_custom_call.1} parent=11 // pred_check
          %p367 = pneg %p119
        $region18: #{tpu_custom_call.1} parent=11 // pred_check_branch
          %369 = sbr.rel (%p367) target = $region20
        $region19: #{tpu_custom_call.1} parent=11 // pred_region
          %s371 = ssub.s32 128, 128
          %372 = vsyncadd [#allocation9], %s371
          %s374 = sshll.u32 [#allocation8], 4
          %s375 = int_to_ptr.vmem [resolvable:$true] %s374
          %377 = dma.hbm_to_vmem [thread:$0]  %s3, 128, %s375, [#allocation9]
        $region20: #{tpu_custom_call.1} parent=11 // pred_fallthru
          _
        // Predicated region
        $region21: #{tpu_custom_call.1} parent=11 // pred_check
          %p378 = pneg %p140
        $region22: #{tpu_custom_call.1} parent=11 // pred_check_branch
          %380 = sbr.rel (%p378) target = $region24
        $region23: #{tpu_custom_call.1} parent=11 // pred_region
          _
        $region24: #{tpu_custom_call.1} parent=11 // pred_fallthru
          _
        // Predicated region
        $region25: #{tpu_custom_call.1} parent=11 // pred_check
          %p381 = pneg %p161
        $region26: #{tpu_custom_call.1} parent=11 // pred_check_branch
          %383 = sbr.rel (%p381) target = $region28
        $region27: #{tpu_custom_call.1} parent=11 // pred_region
          _
        $region28: #{tpu_custom_call.1} parent=11 // pred_fallthru
          _
        // Predicated region
        $region29: #{tpu_custom_call.1} parent=11 // pred_check
          %p384 = pneg %p182
        $region30: #{tpu_custom_call.1} parent=11 // pred_check_branch
          %386 = sbr.rel (%p384) target = $region32
        $region31: #{tpu_custom_call.1} parent=11 // pred_region
          _
        $region32: #{tpu_custom_call.1} parent=11 // pred_fallthru
          _
        // Predicated region
        $region33: #{tpu_custom_call.1} parent=11 // pred_check
          %p387 = pneg %p203
        $region34: #{tpu_custom_call.1} parent=11 // pred_check_branch
          %389 = sbr.rel (%p387) target = $region36
        $region35: #{tpu_custom_call.1} parent=11 // pred_region
          _
        $region36: #{tpu_custom_call.1} parent=11 // pred_fallthru
          _
        // Predicated region
        $region37: #{tpu_custom_call.1} parent=11 // pred_check
          %p390 = pneg %p224
        $region38: #{tpu_custom_call.1} parent=11 // pred_check_branch
          %392 = sbr.rel (%p390) target = $region40
        $region39: #{tpu_custom_call.1} parent=11 // pred_region
          %s394 = ssub.s32 512, 512
          %395 = vsyncadd [#allocation9], %s394
          %s396 = sshll.u32 [#allocation10], 4
          %s397 = int_to_ptr.vmem [resolvable:$true] %s396
          %402 = dma.hbm_to_vmem [thread:$0]  %s8, 512, %s397, [#allocation9], 128, 128, 8
        $region40: #{tpu_custom_call.1} parent=11 // pred_fallthru
          _
        // Predicated region
        $region41: #{tpu_custom_call.1} parent=11 // pred_check
          %p403 = pneg %p245
        $region42: #{tpu_custom_call.1} parent=11 // pred_check_branch
          %405 = sbr.rel (%p403) target = $region44
        $region43: #{tpu_custom_call.1} parent=11 // pred_region
          _
        $region44: #{tpu_custom_call.1} parent=11 // pred_fallthru
          _
        // Predicated region
        $region45: #{tpu_custom_call.1} parent=11 // pred_check
          %p406 = pneg %p266
        $region46: #{tpu_custom_call.1} parent=11 // pred_check_branch
          %408 = sbr.rel (%p406) target = $region48
        $region47: #{tpu_custom_call.1} parent=11 // pred_region
          _
        $region48: #{tpu_custom_call.1} parent=11 // pred_fallthru
          _
        // Predicated region
        $region49: #{tpu_custom_call.1} parent=11 // pred_check
          %p409 = pneg %p287
        $region50: #{tpu_custom_call.1} parent=11 // pred_check_branch
          %411 = sbr.rel (%p409) target = $region52
        $region51: #{tpu_custom_call.1} parent=11 // pred_region
          _
        $region52: #{tpu_custom_call.1} parent=11 // pred_fallthru
          _
      $region12: #{tpu_custom_call.1} parent=5 // pred_fallthru
        _
      %p412 = scmp.lt.s32.totalorder %s25, 2
      // Predicated region
      $region53: #{tpu_custom_call.1} parent=5 // pred_check
        %p413 = pneg %p412
      $region54: #{tpu_custom_call.1} parent=5 // pred_check_branch
        %415 = sbr.rel (%p413) target = $region56
      $region55: #{tpu_custom_call.1} parent=5 // pred_region
        // Predicated region
        $region57: #{tpu_custom_call.1} parent=55 // pred_check
          %p416 = pneg %p45
        $region58: #{tpu_custom_call.1} parent=55 // pred_check_branch
          %418 = sbr.rel (%p416) target = $region60
        $region59: #{tpu_custom_call.1} parent=55 // pred_region
          %p419 = scmp.lt.s32.totalorder %s25, 1
          %s420 = scalar_select %p419, %s25, 1
          %s421 = smul.addr %s420, 3
          %s422 = smul.addr %s421, 8
          %s423 = scalar_lea.vmem %s0, %s422
        $region60: #{tpu_custom_call.1} parent=55 // pred_fallthru
          _
        // Predicated region
        $region61: #{tpu_custom_call.1} parent=55 // pred_check
          %p424 = pneg %p71
        $region62: #{tpu_custom_call.1} parent=55 // pred_check_branch
          %426 = sbr.rel (%p424) target = $region64
        $region63: #{tpu_custom_call.1} parent=55 // pred_region
          %p427 = scmp.lt.s32.totalorder %s25, 1
          %s428 = scalar_select %p427, %s25, 1
          %s429 = smul.addr %s428, 8
          %s430 = scalar_lea.vmem %s1, %s429
        $region64: #{tpu_custom_call.1} parent=55 // pred_fallthru
          _
      $region56: #{tpu_custom_call.1} parent=5 // pred_fallthru
        _
      %p431 = scmp.le.s32.totalorder 1, %s25
      %p432 = scmp.lt.s32.totalorder %s25, 3
      %p433 = pnand %p431, %p432
      %p434 = pneg %p433
      // Predicated region
      $region65: #{tpu_custom_call.1} parent=5 // pred_check
        _
      $region66: #{tpu_custom_call.1} parent=5 // pred_check_branch
        %436 = sbr.rel (%p433) target = $region68
      $region67: #{tpu_custom_call.1} parent=5 // pred_region
        %s437 = ssub.s32 %s25, 1
        // Predicated region
        $region69: #{tpu_custom_call.1} parent=67 // pred_check
          %p438 = pneg %p98
        $region70: #{tpu_custom_call.1} parent=67 // pred_check_branch
          %440 = sbr.rel (%p438) target = $region72
        $region71: #{tpu_custom_call.1} parent=67 // pred_region
          %441 = dma.done [#allocation6], 384
        $region72: #{tpu_custom_call.1} parent=67 // pred_fallthru
          _
        // Predicated region
        $region73: #{tpu_custom_call.1} parent=67 // pred_check
          %p442 = pneg %p119
        $region74: #{tpu_custom_call.1} parent=67 // pred_check_branch
          %444 = sbr.rel (%p442) target = $region76
        $region75: #{tpu_custom_call.1} parent=67 // pred_region
          %445 = dma.done [#allocation9], 128
        $region76: #{tpu_custom_call.1} parent=67 // pred_fallthru
          _
        // Predicated region
        $region77: #{tpu_custom_call.1} parent=67 // pred_check
          %p446 = pneg %p224
        $region78: #{tpu_custom_call.1} parent=67 // pred_check_branch
          %448 = sbr.rel (%p446) target = $region80
        $region79: #{tpu_custom_call.1} parent=67 // pred_region
          %449 = dma.done [#allocation9], 512
        $region80: #{tpu_custom_call.1} parent=67 // pred_fallthru
          _
        %p450 = scmp.lt.s32.totalorder %s30, 1
        %s451 = scalar_select %p450, %s30, 1
        %s452 = smul.addr %s451, 3
        %s453 = smul.addr %s452, 8
        %s454 = scalar_lea.vmem %s0, %s453
        %p455 = pneg %p51
        %p456 = pneg %p48
        %p457 = scmp.lt.s32.totalorder %s30, 1
        %s458 = scalar_select %p457, %s30, 1
        %s459 = smul.addr %s458, 8
        %s460 = scalar_lea.vmem %s1, %s459
        %p461 = pneg %p77
        %p462 = pneg %p74
        %p463 = pneg %p98
        %p464 = pneg %p95
        %p465 = pneg %p119
        %p466 = pneg %p116
        %p467 = pneg %p140
        %p468 = pneg %p137
        %p469 = pneg %p161
        %p470 = pneg %p158
        %p471 = pneg %p182
        %p472 = pneg %p179
        %p473 = pneg %p203
        %p474 = pneg %p200
        %p475 = pneg %p224
        %p476 = pneg %p221
        %p477 = pneg %p245
        %p478 = pneg %p242
        %p479 = pneg %p266
        %p480 = pneg %p263
        %p481 = pneg %p287
        %p482 = pneg %p284
        %p483 = pneg %p313
        %p484 = pneg %p310
        %p485 = scmp.lt.s32.totalorder %s30, 1
        %s486 = scalar_select %p485, %s30, 1
        %s487 = smul.addr %s486, 8
        %s488 = scalar_lea.vmem %s12, %s487
        %p489 = pneg %p339
        %p490 = pneg %p336
        %s491 = sand.u32 %s326, 1
        %s492 = scalar_lea.sflag [#allocation7], %s491
        %s493 = sand.u32 %s326, 1
        %s494 = scalar_lea.vmem [#allocation11], %s493
        %p495 = scmp.lt.s32.totalorder %s30, 1
        %s496 = scalar_select %p495, %s30, 1
        %s497 = smul.addr %s496, 3
        %s498 = smul.addr %s497, 8
        %s499 = scalar_lea.vmem %s0, %s498
        %p500 = scmp.lt.s32.totalorder %s30, 1
        %s501 = scalar_select %p500, %s30, 1
        %s502 = smul.addr %s501, 8
        %s503 = scalar_lea.vmem %s1, %s502
        %p504 = scmp.lt.s32.totalorder %s30, 1
        %s505 = scalar_select %p504, %s30, 1
        %s506 = smul.addr %s505, 8
        %s507 = scalar_lea.vmem %s12, %s506
        %v508 = vld [vmem:[%s499] sm:$0xff]
        %v509 = vld [vmem:[%s499 + $0x8] sm:$0xff]
        %v510 = vld [vmem:[%s499 + $0x10] sm:$0x1]
        %v511 = vld [vmem:[#allocation5] sm:$0xff]
        %v512 = vld [vmem:[#allocation5 + $0x8] sm:$0xff]
        %v513 = vld [vmem:[#allocation5 + $0x10] sm:$0x1]
        %v514 = vadd.f32 %v508, %v511
        %v515 = vadd.f32 %v509, %v512
        %v516 = vadd.f32 %v510, %v513
        %v517 = vld [vmem:[%s503] sm:$0x1f]
        %v518 = vld [vmem:[#allocation8] sm:$0x1f]
        %v519 = vadd.f32 %v517, %v518
        %v520 = vld [vmem:[%s4] sm:$0xff]
        %v521 = vld [vmem:[%s4 + $0x8] sm:$0xff]
        %v522 = vld [vmem:[%s4 + $0x10] sm:$0xff]
        %v523 = vld [vmem:[%s4 + $0x18] sm:$0xff]
        %v524 = vld [vmem:[%s5] sm:$0x1]
        %v526 = vlaneseq
        %v527 = vshrl.u32 %v526, 7
        %v528 = vsub.s32 0, %v527
        %v529 = vrot.slane %v524, %v528
        %vm531 = vcmask 261120
        %v533 = vsel %vm531, %v514, 0
        %v536 = vsel %vm531, %v515, 0
        %v539 = vsel %vm531, %v516, 0
        %541 = vmatprep.subr.mxu0 0.0
        %542 = vmatpush1.msra.mxu0 %v520
        %543 = vmatprep.subr.mxu0 0.0
        %544 = vmatpush1.msra.mxu0 %v521
        %545 = vmatprep.subr.mxu0 0.0
        %546 = vmatpush1.msra.mxu0 %v522
        %547 = vmatprep.subr.mxu0 0.0
        %548 = vmatpush1.msra.mxu0 %v523
        %549 = vmatprep.subr.mxu0 0.0
        %550 = vmatpush1.msra.mxu0 0.0
        %551 = vmatprep.subr.mxu0 0.0
        %552 = vmatpush1.msra.mxu0 0.0
        %553 = vmatprep.subr.mxu0 0.0
        %554 = vmatpush1.msra.mxu0 0.0
        %555 = vmatprep.subr.mxu0 0.0
        %556 = vmatpush1.msra.mxu0 0.0
        %557 = vmatprep.subr.mxu0 0.0
        %558 = vmatpush1.msra.mxu0 0.0
        %559 = vmatprep.subr.mxu0 0.0
        %560 = vmatpush1.msra.mxu0 0.0
        %561 = vmatprep.subr.mxu0 0.0
        %562 = vmatpush1.msra.mxu0 0.0
        %563 = vmatprep.subr.mxu0 0.0
        %564 = vmatpush1.msra.mxu0 0.0
        %565 = vmatprep.subr.mxu0 0.0
        %566 = vmatpush1.msra.mxu0 0.0
        %567 = vmatprep.subr.mxu0 0.0
        %568 = vmatpush1.msra.mxu0 0.0
        %569 = vmatprep.subr.mxu0 0.0
        %570 = vmatpush1.msra.mxu0 0.0
        %571 = vmatprep.subr.mxu0 0.0
        %572 = vmatpush1.msra.mxu0 0.0
        %573 = vmatprep.subr.mxu0 0.0
        %574 = vmatpush1.msra.mxu0 0.0
        %575 = vmatprep.subr.mxu0 0.0
        %576 = vmatpush1.msra.mxu0 0.0
        %577 = vmatprep.subr.mxu0 0.0
        %578 = vmatpush1.msra.mxu0 0.0
        %579 = vmatprep.subr.mxu0 0.0
        %580 = vmatpush1.msra.mxu0 0.0
        %581 = vmatprep.subr.mxu0 0.0
        %582 = vmatpush1.msra.mxu0 0.0
        %583 = vmatprep.subr.mxu0 0.0
        %584 = vmatpush1.msra.mxu0 0.0
        %585 = vmatprep.subr.mxu0 0.0
        %586 = vmatpush1.msra.mxu0 0.0
        %587 = vmatprep.subr.mxu0 0.0
        %588 = vmatpush1.msra.mxu0 0.0
        %589 = vmatprep.subr.mxu0 0.0
        %590 = vmatpush1.msra.mxu0 0.0
        %591 = vmatprep.subr.mxu0 0.0
        %592 = vmatpush1.msra.mxu0 0.0
        %593 = vmatprep.subr.mxu0 0.0
        %594 = vmatpush1.msra.mxu0 0.0
        %595 = vmatprep.subr.mxu0 0.0
        %596 = vmatpush1.msra.mxu0 0.0
        %597 = vmatprep.subr.mxu0 0.0
        %598 = vmatpush1.msra.mxu0 0.0
        %599 = vmatprep.subr.mxu0 0.0
        %600 = vmatpush1.msra.mxu0 0.0
        %601 = vmatprep.subr.mxu0 0.0
        %602 = vmatpush1.msra.mxu0 0.0
        %603 = vmatprep.subr.mxu0 0.0
        %604 = vmatpush1.msra.mxu0 0.0
        %605 = vmatprep.mubr.f32.mxu0 0.0
        %606 = vmatmul.mubr.f32.gmra.mrb[0].mxu0 %v533
        %v607 = vpop.f32.mrb[0].mxu0
        %v608 = vadd.f32 %v529, %v607
        %v609 = vpop.f32.mrb[0].mxu0
        %610 = vmatprep.mubr.f32.mxu0 0.0
        %611 = vmatmul.mubr.f32.gmra.mrb[0].mxu0 %v536
        %v612 = vpop.f32.mrb[0].mxu0
        %v613 = vadd.f32 %v529, %v612
        %v614 = vpop.f32.mrb[0].mxu0
        %615 = vmatprep.mubr.f32.mxu0 0.0
        %616 = vmatmul.mubr.f32.gmra.mrb[0].mxu0 %v539
        %v617 = vpop.f32.mrb[0].mxu0
        %v618 = vadd.f32 %v529, %v617
        %v619 = vpop.f32.mrb[0].mxu0
        %620 = vdwg.mxu0
        %v621 = vld [vmem:[%s6] sm:$0xff]
        %v622 = vld [vmem:[%s6 + $0x8] sm:$0xff]
        %v623 = vld [vmem:[%s6 + $0x10] sm:$0xff]
        %v624 = vld [vmem:[%s6 + $0x18] sm:$0xff]
        %v625 = vld [vmem:[%s7] sm:$0x1]
        %v627 = vlaneseq
        %v628 = vshrl.u32 %v627, 7
        %v629 = vsub.s32 0, %v628
        %v630 = vrot.slane %v625, %v629
        %632 = vmatprep.subr.mxu0 0.0
        %633 = vmatpush1.msra.mxu0 %v621
        %634 = vmatprep.subr.mxu0 0.0
        %635 = vmatpush1.msra.mxu0 %v622
        %636 = vmatprep.subr.mxu0 0.0
        %637 = vmatpush1.msra.mxu0 %v623
        %638 = vmatprep.subr.mxu0 0.0
        %639 = vmatpush1.msra.mxu0 %v624
        %640 = vmatprep.subr.mxu0 0.0
        %641 = vmatpush1.msra.mxu0 0.0
        %642 = vmatprep.subr.mxu0 0.0
        %643 = vmatpush1.msra.mxu0 0.0
        %644 = vmatprep.subr.mxu0 0.0
        %645 = vmatpush1.msra.mxu0 0.0
        %646 = vmatprep.subr.mxu0 0.0
        %647 = vmatpush1.msra.mxu0 0.0
        %648 = vmatprep.subr.mxu0 0.0
        %649 = vmatpush1.msra.mxu0 0.0
        %650 = vmatprep.subr.mxu0 0.0
        %651 = vmatpush1.msra.mxu0 0.0
        %652 = vmatprep.subr.mxu0 0.0
        %653 = vmatpush1.msra.mxu0 0.0
        %654 = vmatprep.subr.mxu0 0.0
        %655 = vmatpush1.msra.mxu0 0.0
        %656 = vmatprep.subr.mxu0 0.0
        %657 = vmatpush1.msra.mxu0 0.0
        %658 = vmatprep.subr.mxu0 0.0
        %659 = vmatpush1.msra.mxu0 0.0
        %660 = vmatprep.subr.mxu0 0.0
        %661 = vmatpush1.msra.mxu0 0.0
        %662 = vmatprep.subr.mxu0 0.0
        %663 = vmatpush1.msra.mxu0 0.0
        %664 = vmatprep.subr.mxu0 0.0
        %665 = vmatpush1.msra.mxu0 0.0
        %666 = vmatprep.subr.mxu0 0.0
        %667 = vmatpush1.msra.mxu0 0.0
        %668 = vmatprep.subr.mxu0 0.0
        %669 = vmatpush1.msra.mxu0 0.0
        %670 = vmatprep.subr.mxu0 0.0
        %671 = vmatpush1.msra.mxu0 0.0
        %672 = vmatprep.subr.mxu0 0.0
        %673 = vmatpush1.msra.mxu0 0.0
        %674 = vmatprep.subr.mxu0 0.0
        %675 = vmatpush1.msra.mxu0 0.0
        %676 = vmatprep.subr.mxu0 0.0
        %677 = vmatpush1.msra.mxu0 0.0
        %678 = vmatprep.subr.mxu0 0.0
        %679 = vmatpush1.msra.mxu0 0.0
        %680 = vmatprep.subr.mxu0 0.0
        %681 = vmatpush1.msra.mxu0 0.0
        %682 = vmatprep.subr.mxu0 0.0
        %683 = vmatpush1.msra.mxu0 0.0
        %684 = vmatprep.subr.mxu0 0.0
        %685 = vmatpush1.msra.mxu0 0.0
        %686 = vmatprep.subr.mxu0 0.0
        %687 = vmatpush1.msra.mxu0 0.0
        %688 = vmatprep.subr.mxu0 0.0
        %689 = vmatpush1.msra.mxu0 0.0
        %690 = vmatprep.subr.mxu0 0.0
        %691 = vmatpush1.msra.mxu0 0.0
        %692 = vmatprep.subr.mxu0 0.0
        %693 = vmatpush1.msra.mxu0 0.0
        %694 = vmatprep.subr.mxu0 0.0
        %695 = vmatpush1.msra.mxu0 0.0
        %696 = vmatprep.mubr.f32.mxu0 0.0
        %697 = vmatmul.mubr.f32.gmra.mrb[0].mxu0 %v533
        %v698 = vpop.f32.mrb[0].mxu0
        %v699 = vadd.f32 %v630, %v698
        %v700 = vpop.f32.mrb[0].mxu0
        %701 = vmatprep.mubr.f32.mxu0 0.0
        %702 = vmatmul.mubr.f32.gmra.mrb[0].mxu0 %v536
        %v703 = vpop.f32.mrb[0].mxu0
        %v704 = vadd.f32 %v630, %v703
        %v705 = vpop.f32.mrb[0].mxu0
        %706 = vmatprep.mubr.f32.mxu0 0.0
        %707 = vmatmul.mubr.f32.gmra.mrb[0].mxu0 %v539
        %v708 = vpop.f32.mrb[0].mxu0
        %v709 = vadd.f32 %v630, %v708
        %v710 = vpop.f32.mrb[0].mxu0
        %711 = vdwg.mxu0
        %v712 = vld [vmem:[#allocation10] sm:$0xff]
        %v713 = vld [vmem:[#allocation10 + $0x8] sm:$0xff]
        %v714 = vld [vmem:[#allocation10 + $0x10] sm:$0xff]
        %v715 = vld [vmem:[#allocation10 + $0x18] sm:$0xff]
        %v716 = vld [vmem:[%s9] sm:$0x1]
        %v718 = vlaneseq
        %v719 = vshrl.u32 %v718, 7
        %v720 = vsub.s32 0, %v719
        %v721 = vrot.slane %v716, %v720
        %v724 = vsel %vm531, %v519, 0
        %726 = vmatprep.subr.mxu0 0.0
        %727 = vmatpush1.msra.mxu0 %v712
        %728 = vmatprep.subr.mxu0 0.0
        %729 = vmatpush1.msra.mxu0 %v713
        %730 = vmatprep.subr.mxu0 0.0
        %731 = vmatpush1.msra.mxu0 %v714
        %732 = vmatprep.subr.mxu0 0.0
        %733 = vmatpush1.msra.mxu0 %v715
        %734 = vmatprep.subr.mxu0 0.0
        %735 = vmatpush1.msra.mxu0 0.0
        %736 = vmatprep.subr.mxu0 0.0
        %737 = vmatpush1.msra.mxu0 0.0
        %738 = vmatprep.subr.mxu0 0.0
        %739 = vmatpush1.msra.mxu0 0.0
        %740 = vmatprep.subr.mxu0 0.0
        %741 = vmatpush1.msra.mxu0 0.0
        %742 = vmatprep.subr.mxu0 0.0
        %743 = vmatpush1.msra.mxu0 0.0
        %744 = vmatprep.subr.mxu0 0.0
        %745 = vmatpush1.msra.mxu0 0.0
        %746 = vmatprep.subr.mxu0 0.0
        %747 = vmatpush1.msra.mxu0 0.0
        %748 = vmatprep.subr.mxu0 0.0
        %749 = vmatpush1.msra.mxu0 0.0
        %750 = vmatprep.subr.mxu0 0.0
        %751 = vmatpush1.msra.mxu0 0.0
        %752 = vmatprep.subr.mxu0 0.0
        %753 = vmatpush1.msra.mxu0 0.0
        %754 = vmatprep.subr.mxu0 0.0
        %755 = vmatpush1.msra.mxu0 0.0
        %756 = vmatprep.subr.mxu0 0.0
        %757 = vmatpush1.msra.mxu0 0.0
        %758 = vmatprep.subr.mxu0 0.0
        %759 = vmatpush1.msra.mxu0 0.0
        %760 = vmatprep.subr.mxu0 0.0
        %761 = vmatpush1.msra.mxu0 0.0
        %762 = vmatprep.subr.mxu0 0.0
        %763 = vmatpush1.msra.mxu0 0.0
        %764 = vmatprep.subr.mxu0 0.0
        %765 = vmatpush1.msra.mxu0 0.0
        %766 = vmatprep.subr.mxu0 0.0
        %767 = vmatpush1.msra.mxu0 0.0
        %768 = vmatprep.subr.mxu0 0.0
        %769 = vmatpush1.msra.mxu0 0.0
        %770 = vmatprep.subr.mxu0 0.0
        %771 = vmatpush1.msra.mxu0 0.0
        %772 = vmatprep.subr.mxu0 0.0
        %773 = vmatpush1.msra.mxu0 0.0
        %774 = vmatprep.subr.mxu0 0.0
        %775 = vmatpush1.msra.mxu0 0.0
        %776 = vmatprep.subr.mxu0 0.0
        %777 = vmatpush1.msra.mxu0 0.0
        %778 = vmatprep.subr.mxu0 0.0
        %779 = vmatpush1.msra.mxu0 0.0
        %780 = vmatprep.subr.mxu0 0.0
        %781 = vmatpush1.msra.mxu0 0.0
        %782 = vmatprep.subr.mxu0 0.0
        %783 = vmatpush1.msra.mxu0 0.0
        %784 = vmatprep.subr.mxu0 0.0
        %785 = vmatpush1.msra.mxu0 0.0
        %786 = vmatprep.subr.mxu0 0.0
        %787 = vmatpush1.msra.mxu0 0.0
        %788 = vmatprep.subr.mxu0 0.0
        %789 = vmatpush1.msra.mxu0 0.0
        %790 = vmatprep.mubr.f32.mxu0 0.0
        %791 = vmatmul.mubr.f32.gmra.mrb[0].mxu0 %v724
        %v792 = vpop.f32.mrb[0].mxu0
        %v793 = vadd.f32 %v721, %v792
        %v794 = vpop.f32.mrb[0].mxu0
        %795 = vdwg.mxu0
        %vm796 = vcmask 126976
        %797 = vst.msk [vmem:[#allocation2] sm:$0x1f] %vm796, %v793
        %vm798 = vcmask 130048
        %799 = vst.msk [vmem:[#allocation3] sm:$0xff] %vm798, %v608
        %800 = vst.msk [vmem:[#allocation3 + $0x8] sm:$0xff] %vm798, %v613
        %vm801 = vcmask 122880
        %802 = vst.msk [vmem:[#allocation3 + $0x10] sm:$0x1] %vm801, %v618
        %803 = vst.msk [vmem:[#allocation4] sm:$0xff] %vm531, %v699
        %804 = vst.msk [vmem:[#allocation4 + $0x8] sm:$0xff] %vm531, %v704
        %vm805 = vcmask 253952
        %806 = vst.msk [vmem:[#allocation4 + $0x10] sm:$0x1] %vm805, %v709
        %808 = vrot.lane.b32.xlu0 %v793, 112
        %v809 = vpop.permute.xlu0 %808
        %s811 = scalar_lea.vmem [#allocation2], 8
        %812 = vst.msk [vmem:[%s811] sm:$0x1f] %vm796, %v809
        %816 = vrot.lane.b32.xlu0 %v608, 112
        %v817 = vpop.permute.xlu0 %816
        %818 = vrot.lane.b32.xlu0 %v613, 112
        %v819 = vpop.permute.xlu0 %818
        %820 = vrot.lane.b32.xlu0 %v618, 112
        %v821 = vpop.permute.xlu0 %820
        %s825 = scalar_lea.vmem [#allocation3], 24
        %826 = vst.msk [vmem:[%s825] sm:$0xff] %vm798, %v817
        %827 = vst.msk [vmem:[%s825 + $0x8] sm:$0xff] %vm798, %v819
        %828 = vst.msk [vmem:[%s825 + $0x10] sm:$0x1] %vm801, %v821
        %832 = vrot.lane.b32.xlu0 %v699, 96
        %v833 = vpop.permute.xlu0 %832
        %834 = vrot.lane.b32.xlu0 %v704, 96
        %v835 = vpop.permute.xlu0 %834
        %836 = vrot.lane.b32.xlu0 %v709, 96
        %v837 = vpop.permute.xlu0 %836
        %s841 = scalar_lea.vmem [#allocation4], 24
        %842 = vst.msk [vmem:[%s841] sm:$0xff] %vm531, %v833
        %843 = vst.msk [vmem:[%s841 + $0x8] sm:$0xff] %vm531, %v835
        %844 = vst.msk [vmem:[%s841 + $0x10] sm:$0x1] %vm805, %v837
        %v845 = vld [vmem:[#allocation2] sm:$0x1f]
        %v846 = vld [vmem:[#allocation2 + $0x8] sm:$0x1f]
        %v847 = vld [vmem:[#allocation3] sm:$0xff]
        %v848 = vld [vmem:[#allocation3 + $0x8] sm:$0xff]
        %v849 = vld [vmem:[#allocation3 + $0x10] sm:$0x1]
        %v850 = vld [vmem:[#allocation3 + $0x18] sm:$0xff]
        %v851 = vld [vmem:[#allocation3 + $0x20] sm:$0xff]
        %v852 = vld [vmem:[#allocation3 + $0x28] sm:$0x1]
        %v854 = vsel %vm798, %v845, 0
        %v857 = vsel %vm798, %v847, 0
        %v860 = vsel %vm798, %v848, 0
        %v863 = vsel %vm798, %v849, 0
        %865 = vmatprep.subr.mxu0 0.0
        %866 = vmatpush1.xpose.msra.mxu0 %v857
        %867 = vmatprep.subr.mxu0 0.0
        %868 = vmatpush1.xpose.msra.mxu0 %v860
        %869 = vmatprep.subr.mxu0 0.0
        %870 = vmatpush1.xpose.msra.mxu0 %v863
        %871 = vmatprep.subr.mxu0 0.0
        %872 = vmatpush1.xpose.msra.mxu0 0.0
        %873 = vmatprep.subr.mxu0 0.0
        %874 = vmatpush1.xpose.msra.mxu0 0.0
        %875 = vmatprep.subr.mxu0 0.0
        %876 = vmatpush1.xpose.msra.mxu0 0.0
        %877 = vmatprep.subr.mxu0 0.0
        %878 = vmatpush1.xpose.msra.mxu0 0.0
        %879 = vmatprep.subr.mxu0 0.0
        %880 = vmatpush1.xpose.msra.mxu0 0.0
        %881 = vmatprep.subr.mxu0 0.0
        %882 = vmatpush1.xpose.msra.mxu0 0.0
        %883 = vmatprep.subr.mxu0 0.0
        %884 = vmatpush1.xpose.msra.mxu0 0.0
        %885 = vmatprep.subr.mxu0 0.0
        %886 = vmatpush1.xpose.msra.mxu0 0.0
        %887 = vmatprep.subr.mxu0 0.0
        %888 = vmatpush1.xpose.msra.mxu0 0.0
        %889 = vmatprep.subr.mxu0 0.0
        %890 = vmatpush1.xpose.msra.mxu0 0.0
        %891 = vmatprep.subr.mxu0 0.0
        %892 = vmatpush1.xpose.msra.mxu0 0.0
        %893 = vmatprep.subr.mxu0 0.0
        %894 = vmatpush1.xpose.msra.mxu0 0.0
        %895 = vmatprep.subr.mxu0 0.0
        %896 = vmatpush1.xpose.msra.mxu0 0.0
        %897 = vmatprep.subr.mxu0 0.0
        %898 = vmatpush1.xpose.msra.mxu0 0.0
        %899 = vmatprep.subr.mxu0 0.0
        %900 = vmatpush1.xpose.msra.mxu0 0.0
        %901 = vmatprep.subr.mxu0 0.0
        %902 = vmatpush1.xpose.msra.mxu0 0.0
        %903 = vmatprep.subr.mxu0 0.0
        %904 = vmatpush1.xpose.msra.mxu0 0.0
        %905 = vmatprep.subr.mxu0 0.0
        %906 = vmatpush1.xpose.msra.mxu0 0.0
        %907 = vmatprep.subr.mxu0 0.0
        %908 = vmatpush1.xpose.msra.mxu0 0.0
        %909 = vmatprep.subr.mxu0 0.0
        %910 = vmatpush1.xpose.msra.mxu0 0.0
        %911 = vmatprep.subr.mxu0 0.0
        %912 = vmatpush1.xpose.msra.mxu0 0.0
        %913 = vmatprep.subr.mxu0 0.0
        %914 = vmatpush1.xpose.msra.mxu0 0.0
        %915 = vmatprep.subr.mxu0 0.0
        %916 = vmatpush1.xpose.msra.mxu0 0.0
        %917 = vmatprep.subr.mxu0 0.0
        %918 = vmatpush1.xpose.msra.mxu0 0.0
        %919 = vmatprep.subr.mxu0 0.0
        %920 = vmatpush1.xpose.msra.mxu0 0.0
        %921 = vmatprep.subr.mxu0 0.0
        %922 = vmatpush1.xpose.msra.mxu0 0.0
        %923 = vmatprep.subr.mxu0 0.0
        %924 = vmatpush1.xpose.msra.mxu0 0.0
        %925 = vmatprep.subr.mxu0 0.0
        %926 = vmatpush1.xpose.msra.mxu0 0.0
        %927 = vmatprep.subr.mxu0 0.0
        %928 = vmatpush1.xpose.msra.mxu0 0.0
        %929 = vmatprep.mubr.f32.mxu0 0.0
        %930 = vmatmul.mubr.f32.gmra.mrb[0].mxu0 %v854
        %v931 = vpop.f32.mrb[0].mxu0
        %v932 = vadd.f32 0.0, %v931
        %v933 = vpop.f32.mrb[0].mxu0
        %934 = vdwg.mxu0
        %v936 = vsel %vm798, %v846, 0
        %v939 = vsel %vm798, %v850, 0
        %v942 = vsel %vm798, %v851, 0
        %v945 = vsel %vm798, %v852, 0
        %947 = vmatprep.subr.mxu0 0.0
        %948 = vmatpush1.xpose.msra.mxu0 %v939
        %949 = vmatprep.subr.mxu0 0.0
        %950 = vmatpush1.xpose.msra.mxu0 %v942
        %951 = vmatprep.subr.mxu0 0.0
        %952 = vmatpush1.xpose.msra.mxu0 %v945
        %953 = vmatprep.subr.mxu0 0.0
        %954 = vmatpush1.xpose.msra.mxu0 0.0
        %955 = vmatprep.subr.mxu0 0.0
        %956 = vmatpush1.xpose.msra.mxu0 0.0
        %957 = vmatprep.subr.mxu0 0.0
        %958 = vmatpush1.xpose.msra.mxu0 0.0
        %959 = vmatprep.subr.mxu0 0.0
        %960 = vmatpush1.xpose.msra.mxu0 0.0
        %961 = vmatprep.subr.mxu0 0.0
        %962 = vmatpush1.xpose.msra.mxu0 0.0
        %963 = vmatprep.subr.mxu0 0.0
        %964 = vmatpush1.xpose.msra.mxu0 0.0
        %965 = vmatprep.subr.mxu0 0.0
        %966 = vmatpush1.xpose.msra.mxu0 0.0
        %967 = vmatprep.subr.mxu0 0.0
        %968 = vmatpush1.xpose.msra.mxu0 0.0
        %969 = vmatprep.subr.mxu0 0.0
        %970 = vmatpush1.xpose.msra.mxu0 0.0
        %971 = vmatprep.subr.mxu0 0.0
        %972 = vmatpush1.xpose.msra.mxu0 0.0
        %973 = vmatprep.subr.mxu0 0.0
        %974 = vmatpush1.xpose.msra.mxu0 0.0
        %975 = vmatprep.subr.mxu0 0.0
        %976 = vmatpush1.xpose.msra.mxu0 0.0
        %977 = vmatprep.subr.mxu0 0.0
        %978 = vmatpush1.xpose.msra.mxu0 0.0
        %979 = vmatprep.subr.mxu0 0.0
        %980 = vmatpush1.xpose.msra.mxu0 0.0
        %981 = vmatprep.subr.mxu0 0.0
        %982 = vmatpush1.xpose.msra.mxu0 0.0
        %983 = vmatprep.subr.mxu0 0.0
        %984 = vmatpush1.xpose.msra.mxu0 0.0
        %985 = vmatprep.subr.mxu0 0.0
        %986 = vmatpush1.xpose.msra.mxu0 0.0
        %987 = vmatprep.subr.mxu0 0.0
        %988 = vmatpush1.xpose.msra.mxu0 0.0
        %989 = vmatprep.subr.mxu0 0.0
        %990 = vmatpush1.xpose.msra.mxu0 0.0
        %991 = vmatprep.subr.mxu0 0.0
        %992 = vmatpush1.xpose.msra.mxu0 0.0
        %993 = vmatprep.subr.mxu0 0.0
        %994 = vmatpush1.xpose.msra.mxu0 0.0
        %995 = vmatprep.subr.mxu0 0.0
        %996 = vmatpush1.xpose.msra.mxu0 0.0
        %997 = vmatprep.subr.mxu0 0.0
        %998 = vmatpush1.xpose.msra.mxu0 0.0
        %999 = vmatprep.subr.mxu0 0.0
        %1000 = vmatpush1.xpose.msra.mxu0 0.0
        %1001 = vmatprep.subr.mxu0 0.0
        %1002 = vmatpush1.xpose.msra.mxu0 0.0
        %1003 = vmatprep.subr.mxu0 0.0
        %1004 = vmatpush1.xpose.msra.mxu0 0.0
        %1005 = vmatprep.subr.mxu0 0.0
        %1006 = vmatpush1.xpose.msra.mxu0 0.0
        %1007 = vmatprep.subr.mxu0 0.0
        %1008 = vmatpush1.xpose.msra.mxu0 0.0
        %1009 = vmatprep.subr.mxu0 0.0
        %1010 = vmatpush1.xpose.msra.mxu0 0.0
        %1011 = vmatprep.mubr.f32.mxu0 0.0
        %1012 = vmatmul.mubr.f32.gmra.mrb[0].mxu0 %v936
        %v1013 = vpop.f32.mrb[0].mxu0
        %v1014 = vadd.f32 0.0, %v1013
        %v1015 = vpop.f32.mrb[0].mxu0
        %1016 = vdwg.mxu0
        %vm1017 = vcmask 135168
        %v1018 = vsel %vm1017, %v932, -inf
        %1019 = vmax.xlane.f32.xlu0 %v1018
        %v1020 = vpop.xlane.xlu0 %1019
        %v1021 = vsel %vm1017, %v1014, -inf
        %1022 = vmax.xlane.f32.xlu0 %v1021
        %v1023 = vpop.xlane.xlu0 %1022
        %v1024 = vsub.f32 %v932, %v1020
        %v1025 = vsub.f32 %v1014, %v1023
        %v1026 = vmul.f32 %v1024, 1.442695
        %v1027 = vpow.pop %v1026
        %v1028 = vmul.f32 %v1025, 1.442695
        %v1029 = vpow.pop %v1028
        %v1030 = vsel %vm1017, %v1027, 0.0
        %1031 = vadd.xlane.f32.xlu0 %v1030
        %v1032 = vpop.xlane.xlu0 %1031
        %v1033 = vsel %vm1017, %v1029, 0.0
        %1034 = vadd.xlane.f32.xlu0 %v1033
        %v1035 = vpop.xlane.xlu0 %1034
        %v1036 = vrcp.pop %v1032
        %v1037 = vrcp.pop %v1035
        %v1038 = vmul.f32 %v1027, %v1036
        %v1039 = vmul.f32 %v1029, %v1037
        %vm1040 = vcmask 131072
        %v1041 = vsel %vm1040, %v1038, 0.0
        %v1042 = vsel %vm1040, %v1039, 0.0
        %v1043 = vadd.f32 %v1041, %v1042
        %v1044 = vmul.f32 %v1043, 0.5
        %1045 = vst.msk [vmem:[%s494] sm:$0x1] %vm1040, %v1044
        %v1046 = vld [vmem:[#allocation4] sm:$0xff]
        %v1047 = vld [vmem:[#allocation4 + $0x8] sm:$0xff]
        %v1048 = vld [vmem:[#allocation4 + $0x10] sm:$0x1]
        %v1049 = vld [vmem:[#allocation4 + $0x18] sm:$0xff]
        %v1050 = vld [vmem:[#allocation4 + $0x20] sm:$0xff]
        %v1051 = vld [vmem:[#allocation4 + $0x28] sm:$0x1]
        %vm1052 = vcmask 138240
        %v1054 = vsel %vm1052, %v1027, 0
        %vm1056 = vcmask 1040384
        %v1058 = vsel %vm1056, %v1048, 0
        %1060 = vmatprep.subr.mxu0 0.0
        %1061 = vmatpush1.msra.mxu0 %v1046
        %1062 = vmatprep.subr.mxu0 0.0
        %1063 = vmatpush1.msra.mxu0 %v1047
        %1064 = vmatprep.subr.mxu0 0.0
        %1065 = vmatpush1.msra.mxu0 %v1058
        %1066 = vmatprep.subr.mxu0 0.0
        %1067 = vmatpush1.msra.mxu0 0.0
        %1068 = vmatprep.subr.mxu0 0.0
        %1069 = vmatpush1.msra.mxu0 0.0
        %1070 = vmatprep.subr.mxu0 0.0
        %1071 = vmatpush1.msra.mxu0 0.0
        %1072 = vmatprep.subr.mxu0 0.0
        %1073 = vmatpush1.msra.mxu0 0.0
        %1074 = vmatprep.subr.mxu0 0.0
        %1075 = vmatpush1.msra.mxu0 0.0
        %1076 = vmatprep.subr.mxu0 0.0
        %1077 = vmatpush1.msra.mxu0 0.0
        %1078 = vmatprep.subr.mxu0 0.0
        %1079 = vmatpush1.msra.mxu0 0.0
        %1080 = vmatprep.subr.mxu0 0.0
        %1081 = vmatpush1.msra.mxu0 0.0
        %1082 = vmatprep.subr.mxu0 0.0
        %1083 = vmatpush1.msra.mxu0 0.0
        %1084 = vmatprep.subr.mxu0 0.0
        %1085 = vmatpush1.msra.mxu0 0.0
        %1086 = vmatprep.subr.mxu0 0.0
        %1087 = vmatpush1.msra.mxu0 0.0
        %1088 = vmatprep.subr.mxu0 0.0
        %1089 = vmatpush1.msra.mxu0 0.0
        %1090 = vmatprep.subr.mxu0 0.0
        %1091 = vmatpush1.msra.mxu0 0.0
        %1092 = vmatprep.subr.mxu0 0.0
        %1093 = vmatpush1.msra.mxu0 0.0
        %1094 = vmatprep.subr.mxu0 0.0
        %1095 = vmatpush1.msra.mxu0 0.0
        %1096 = vmatprep.subr.mxu0 0.0
        %1097 = vmatpush1.msra.mxu0 0.0
        %1098 = vmatprep.subr.mxu0 0.0
        %1099 = vmatpush1.msra.mxu0 0.0
        %1100 = vmatprep.subr.mxu0 0.0
        %1101 = vmatpush1.msra.mxu0 0.0
        %1102 = vmatprep.subr.mxu0 0.0
        %1103 = vmatpush1.msra.mxu0 0.0
        %1104 = vmatprep.subr.mxu0 0.0
        %1105 = vmatpush1.msra.mxu0 0.0
        %1106 = vmatprep.subr.mxu0 0.0
        %1107 = vmatpush1.msra.mxu0 0.0
        %1108 = vmatprep.subr.mxu0 0.0
        %1109 = vmatpush1.msra.mxu0 0.0
        %1110 = vmatprep.subr.mxu0 0.0
        %1111 = vmatpush1.msra.mxu0 0.0
        %1112 = vmatprep.subr.mxu0 0.0
        %1113 = vmatpush1.msra.mxu0 0.0
        %1114 = vmatprep.subr.mxu0 0.0
        %1115 = vmatpush1.msra.mxu0 0.0
        %1116 = vmatprep.subr.mxu0 0.0
        %1117 = vmatpush1.msra.mxu0 0.0
        %1118 = vmatprep.subr.mxu0 0.0
        %1119 = vmatpush1.msra.mxu0 0.0
        %1120 = vmatprep.subr.mxu0 0.0
        %1121 = vmatpush1.msra.mxu0 0.0
        %1122 = vmatprep.subr.mxu0 0.0
        %1123 = vmatpush1.msra.mxu0 0.0
        %1124 = vmatprep.mubr.f32.mxu0 0.0
        %1125 = vmatmul.mubr.f32.gmra.mrb[0].mxu0 %v1054
        %v1126 = vpop.f32.mrb[0].mxu0
        %v1127 = vadd.f32 0.0, %v1126
        %v1128 = vpop.f32.mrb[0].mxu0
        %1129 = vdwg.mxu0
        %v1131 = vsel %vm1052, %v1029, 0
        %v1134 = vsel %vm1056, %v1051, 0
        %1136 = vmatprep.subr.mxu0 0.0
        %1137 = vmatpush1.msra.mxu0 %v1049
        %1138 = vmatprep.subr.mxu0 0.0
        %1139 = vmatpush1.msra.mxu0 %v1050
        %1140 = vmatprep.subr.mxu0 0.0
        %1141 = vmatpush1.msra.mxu0 %v1134
        %1142 = vmatprep.subr.mxu0 0.0
        %1143 = vmatpush1.msra.mxu0 0.0
        %1144 = vmatprep.subr.mxu0 0.0
        %1145 = vmatpush1.msra.mxu0 0.0
        %1146 = vmatprep.subr.mxu0 0.0
        %1147 = vmatpush1.msra.mxu0 0.0
        %1148 = vmatprep.subr.mxu0 0.0
        %1149 = vmatpush1.msra.mxu0 0.0
        %1150 = vmatprep.subr.mxu0 0.0
        %1151 = vmatpush1.msra.mxu0 0.0
        %1152 = vmatprep.subr.mxu0 0.0
        %1153 = vmatpush1.msra.mxu0 0.0
        %1154 = vmatprep.subr.mxu0 0.0
        %1155 = vmatpush1.msra.mxu0 0.0
        %1156 = vmatprep.subr.mxu0 0.0
        %1157 = vmatpush1.msra.mxu0 0.0
        %1158 = vmatprep.subr.mxu0 0.0
        %1159 = vmatpush1.msra.mxu0 0.0
        %1160 = vmatprep.subr.mxu0 0.0
        %1161 = vmatpush1.msra.mxu0 0.0
        %1162 = vmatprep.subr.mxu0 0.0
        %1163 = vmatpush1.msra.mxu0 0.0
        %1164 = vmatprep.subr.mxu0 0.0
        %1165 = vmatpush1.msra.mxu0 0.0
        %1166 = vmatprep.subr.mxu0 0.0
        %1167 = vmatpush1.msra.mxu0 0.0
        %1168 = vmatprep.subr.mxu0 0.0
        %1169 = vmatpush1.msra.mxu0 0.0
        %1170 = vmatprep.subr.mxu0 0.0
        %1171 = vmatpush1.msra.mxu0 0.0
        %1172 = vmatprep.subr.mxu0 0.0
        %1173 = vmatpush1.msra.mxu0 0.0
        %1174 = vmatprep.subr.mxu0 0.0
        %1175 = vmatpush1.msra.mxu0 0.0
        %1176 = vmatprep.subr.mxu0 0.0
        %1177 = vmatpush1.msra.mxu0 0.0
        %1178 = vmatprep.subr.mxu0 0.0
        %1179 = vmatpush1.msra.mxu0 0.0
        %1180 = vmatprep.subr.mxu0 0.0
        %1181 = vmatpush1.msra.mxu0 0.0
        %1182 = vmatprep.subr.mxu0 0.0
        %1183 = vmatpush1.msra.mxu0 0.0
        %1184 = vmatprep.subr.mxu0 0.0
        %1185 = vmatpush1.msra.mxu0 0.0
        %1186 = vmatprep.subr.mxu0 0.0
        %1187 = vmatpush1.msra.mxu0 0.0
        %1188 = vmatprep.subr.mxu0 0.0
        %1189 = vmatpush1.msra.mxu0 0.0
        %1190 = vmatprep.subr.mxu0 0.0
        %1191 = vmatpush1.msra.mxu0 0.0
        %1192 = vmatprep.subr.mxu0 0.0
        %1193 = vmatpush1.msra.mxu0 0.0
        %1194 = vmatprep.subr.mxu0 0.0
        %1195 = vmatpush1.msra.mxu0 0.0
        %1196 = vmatprep.subr.mxu0 0.0
        %1197 = vmatpush1.msra.mxu0 0.0
        %1198 = vmatprep.subr.mxu0 0.0
        %1199 = vmatpush1.msra.mxu0 0.0
        %1200 = vmatprep.mubr.f32.mxu0 0.0
        %1201 = vmatmul.mubr.f32.gmra.mrb[0].mxu0 %v1131
        %v1202 = vpop.f32.mrb[0].mxu0
        %v1203 = vadd.f32 0.0, %v1202
        %v1204 = vpop.f32.mrb[0].mxu0
        %1205 = vdwg.mxu0
        %v1206 = vmul.f32 %v1127, %v1036
        %v1207 = vmul.f32 %v1203, %v1037
        %v1208 = vadd.f32 %v1206, 3.0
        %v1209 = vadd.f32 %v1207, 3.0
        %v1210 = vmax.f32 %v1208, 0.0
        %v1211 = vmax.f32 %v1209, 0.0
        %v1212 = vmin.f32 %v1210, 6.0
        %v1213 = vmin.f32 %v1211, 6.0
        %v1214 = vmul.f32 %v1206, %v1212
        %v1215 = vmul.f32 %v1207, %v1213
        %v1216 = vmul.f32 %v1214, 0.16666667
        %v1217 = vmul.f32 %v1215, 0.16666667
        %v1218 = vld [vmem:[%s10] sm:$0xff]
        %v1219 = vld [vmem:[%s10 + $0x8] sm:$0xff]
        %v1220 = vld [vmem:[%s10 + $0x10] sm:$0xff]
        %v1221 = vld [vmem:[%s10 + $0x18] sm:$0xff]
        %v1222 = vld [vmem:[%s10 + $0x20] sm:$0xff]
        %v1223 = vld [vmem:[%s10 + $0x28] sm:$0xff]
        %v1224 = vld [vmem:[%s10 + $0x30] sm:$0xff]
        %v1225 = vld [vmem:[%s10 + $0x38] sm:$0xff]
        %v1227 = vsel %vm531, %v1216, 0
        %1229 = vmatprep.subr.mxu0 0.0
        %1230 = vmatpush1.msra.mxu0 %v1218
        %1231 = vmatprep.subr.mxu0 0.0
        %1232 = vmatpush1.msra.mxu0 %v1219
        %1233 = vmatprep.subr.mxu0 0.0
        %1234 = vmatpush1.msra.mxu0 %v1220
        %1235 = vmatprep.subr.mxu0 0.0
        %1236 = vmatpush1.msra.mxu0 %v1221
        %1237 = vmatprep.subr.mxu0 0.0
        %1238 = vmatpush1.msra.mxu0 0.0
        %1239 = vmatprep.subr.mxu0 0.0
        %1240 = vmatpush1.msra.mxu0 0.0
        %1241 = vmatprep.subr.mxu0 0.0
        %1242 = vmatpush1.msra.mxu0 0.0
        %1243 = vmatprep.subr.mxu0 0.0
        %1244 = vmatpush1.msra.mxu0 0.0
        %1245 = vmatprep.subr.mxu0 0.0
        %1246 = vmatpush1.msra.mxu0 0.0
        %1247 = vmatprep.subr.mxu0 0.0
        %1248 = vmatpush1.msra.mxu0 0.0
        %1249 = vmatprep.subr.mxu0 0.0
        %1250 = vmatpush1.msra.mxu0 0.0
        %1251 = vmatprep.subr.mxu0 0.0
        %1252 = vmatpush1.msra.mxu0 0.0
        %1253 = vmatprep.subr.mxu0 0.0
        %1254 = vmatpush1.msra.mxu0 0.0
        %1255 = vmatprep.subr.mxu0 0.0
        %1256 = vmatpush1.msra.mxu0 0.0
        %1257 = vmatprep.subr.mxu0 0.0
        %1258 = vmatpush1.msra.mxu0 0.0
        %1259 = vmatprep.subr.mxu0 0.0
        %1260 = vmatpush1.msra.mxu0 0.0
        %1261 = vmatprep.subr.mxu0 0.0
        %1262 = vmatpush1.msra.mxu0 0.0
        %1263 = vmatprep.subr.mxu0 0.0
        %1264 = vmatpush1.msra.mxu0 0.0
        %1265 = vmatprep.subr.mxu0 0.0
        %1266 = vmatpush1.msra.mxu0 0.0
        %1267 = vmatprep.subr.mxu0 0.0
        %1268 = vmatpush1.msra.mxu0 0.0
        %1269 = vmatprep.subr.mxu0 0.0
        %1270 = vmatpush1.msra.mxu0 0.0
        %1271 = vmatprep.subr.mxu0 0.0
        %1272 = vmatpush1.msra.mxu0 0.0
        %1273 = vmatprep.subr.mxu0 0.0
        %1274 = vmatpush1.msra.mxu0 0.0
        %1275 = vmatprep.subr.mxu0 0.0
        %1276 = vmatpush1.msra.mxu0 0.0
        %1277 = vmatprep.subr.mxu0 0.0
        %1278 = vmatpush1.msra.mxu0 0.0
        %1279 = vmatprep.subr.mxu0 0.0
        %1280 = vmatpush1.msra.mxu0 0.0
        %1281 = vmatprep.subr.mxu0 0.0
        %1282 = vmatpush1.msra.mxu0 0.0
        %1283 = vmatprep.subr.mxu0 0.0
        %1284 = vmatpush1.msra.mxu0 0.0
        %1285 = vmatprep.subr.mxu0 0.0
        %1286 = vmatpush1.msra.mxu0 0.0
        %1287 = vmatprep.subr.mxu0 0.0
        %1288 = vmatpush1.msra.mxu0 0.0
        %1289 = vmatprep.subr.mxu0 0.0
        %1290 = vmatpush1.msra.mxu0 0.0
        %1291 = vmatprep.subr.mxu0 0.0
        %1292 = vmatpush1.msra.mxu0 0.0
        %1293 = vmatprep.mubr.f32.mxu0 0.0
        %1294 = vmatmul.mubr.f32.gmra.mrb[0].mxu0 %v1227
        %v1295 = vpop.f32.mrb[0].mxu0
        %v1296 = vadd.f32 0.0, %v1295
        %v1297 = vpop.f32.mrb[0].mxu0
        %1298 = vdwg.mxu0
        %v1300 = vsel %vm531, %v1217, 0
        %1302 = vmatprep.subr.mxu0 0.0
        %1303 = vmatpush1.msra.mxu0 %v1222
        %1304 = vmatprep.subr.mxu0 0.0
        %1305 = vmatpush1.msra.mxu0 %v1223
        %1306 = vmatprep.subr.mxu0 0.0
        %1307 = vmatpush1.msra.mxu0 %v1224
        %1308 = vmatprep.subr.mxu0 0.0
        %1309 = vmatpush1.msra.mxu0 %v1225
        %1310 = vmatprep.subr.mxu0 0.0
        %1311 = vmatpush1.msra.mxu0 0.0
        %1312 = vmatprep.subr.mxu0 0.0
        %1313 = vmatpush1.msra.mxu0 0.0
        %1314 = vmatprep.subr.mxu0 0.0
        %1315 = vmatpush1.msra.mxu0 0.0
        %1316 = vmatprep.subr.mxu0 0.0
        %1317 = vmatpush1.msra.mxu0 0.0
        %1318 = vmatprep.subr.mxu0 0.0
        %1319 = vmatpush1.msra.mxu0 0.0
        %1320 = vmatprep.subr.mxu0 0.0
        %1321 = vmatpush1.msra.mxu0 0.0
        %1322 = vmatprep.subr.mxu0 0.0
        %1323 = vmatpush1.msra.mxu0 0.0
        %1324 = vmatprep.subr.mxu0 0.0
        %1325 = vmatpush1.msra.mxu0 0.0
        %1326 = vmatprep.subr.mxu0 0.0
        %1327 = vmatpush1.msra.mxu0 0.0
        %1328 = vmatprep.subr.mxu0 0.0
        %1329 = vmatpush1.msra.mxu0 0.0
        %1330 = vmatprep.subr.mxu0 0.0
        %1331 = vmatpush1.msra.mxu0 0.0
        %1332 = vmatprep.subr.mxu0 0.0
        %1333 = vmatpush1.msra.mxu0 0.0
        %1334 = vmatprep.subr.mxu0 0.0
        %1335 = vmatpush1.msra.mxu0 0.0
        %1336 = vmatprep.subr.mxu0 0.0
        %1337 = vmatpush1.msra.mxu0 0.0
        %1338 = vmatprep.subr.mxu0 0.0
        %1339 = vmatpush1.msra.mxu0 0.0
        %1340 = vmatprep.subr.mxu0 0.0
        %1341 = vmatpush1.msra.mxu0 0.0
        %1342 = vmatprep.subr.mxu0 0.0
        %1343 = vmatpush1.msra.mxu0 0.0
        %1344 = vmatprep.subr.mxu0 0.0
        %1345 = vmatpush1.msra.mxu0 0.0
        %1346 = vmatprep.subr.mxu0 0.0
        %1347 = vmatpush1.msra.mxu0 0.0
        %1348 = vmatprep.subr.mxu0 0.0
        %1349 = vmatpush1.msra.mxu0 0.0
        %1350 = vmatprep.subr.mxu0 0.0
        %1351 = vmatpush1.msra.mxu0 0.0
        %1352 = vmatprep.subr.mxu0 0.0
        %1353 = vmatpush1.msra.mxu0 0.0
        %1354 = vmatprep.subr.mxu0 0.0
        %1355 = vmatpush1.msra.mxu0 0.0
        %1356 = vmatprep.subr.mxu0 0.0
        %1357 = vmatpush1.msra.mxu0 0.0
        %1358 = vmatprep.subr.mxu0 0.0
        %1359 = vmatpush1.msra.mxu0 0.0
        %1360 = vmatprep.subr.mxu0 0.0
        %1361 = vmatpush1.msra.mxu0 0.0
        %1362 = vmatprep.subr.mxu0 0.0
        %1363 = vmatpush1.msra.mxu0 0.0
        %1364 = vmatprep.subr.mxu0 0.0
        %1365 = vmatpush1.msra.mxu0 0.0
        %1366 = vmatprep.mubr.f32.mxu0 0.0
        %1367 = vmatmul.mubr.f32.gmra.mrb[0].mxu0 %v1300
        %v1368 = vpop.f32.mrb[0].mxu0
        %v1369 = vadd.f32 0.0, %v1368
        %v1370 = vpop.f32.mrb[0].mxu0
        %1371 = vdwg.mxu0
        %vm1372 = vcmask 520192
        %v1373 = vsel %vm1372, %v1296, 0.0
        %v1374 = vsel %vm1372, %v1369, 0.0
        %v1375 = vadd.f32 %v1373, %v1374
        %v1376 = vld [vmem:[%s11] sm:$0x1]
        %v1378 = vlaneseq
        %v1379 = vshrl.u32 %v1378, 7
        %v1380 = vsub.s32 0, %v1379
        %v1381 = vrot.slane %v1376, %v1380
        %v1383 = vadd.f32 %v1375, %v1381
        %1384 = vst.msk [vmem:[%s507] sm:$0x1f] %vm1372, %v1383
        %p1385 = scmp.lt.s32.totalorder %s30, 1
        %s1386 = scalar_select %p1385, %s30, 1
        %s1387 = smul.addr %s1386, 8
        %s1388 = scalar_lea.vmem %s12, %s1387
        %s1389 = sand.u32 %s326, 1
        %s1390 = scalar_lea.sflag [#allocation7], %s1389
        %s1391 = sand.u32 %s326, 1
        %s1392 = scalar_lea.vmem [#allocation11], %s1391
        // Predicated region
        $region81: #{tpu_custom_call.1} parent=67 // pred_check
          %p1393 = pneg %p310
        $region82: #{tpu_custom_call.1} parent=67 // pred_check_branch
          %1395 = sbr.rel (%p1393) target = $region84
        $region83: #{tpu_custom_call.1} parent=67 // pred_region
          _
        $region84: #{tpu_custom_call.1} parent=67 // pred_fallthru
          _
        // Predicated region
        $region85: #{tpu_custom_call.1} parent=67 // pred_check
          %p1396 = pneg %p336
        $region86: #{tpu_custom_call.1} parent=67 // pred_check_branch
          %1398 = sbr.rel (%p1396) target = $region88
        $region87: #{tpu_custom_call.1} parent=67 // pred_region
          %s1400 = ssub.s32 16, 16
          %1401 = vsyncadd %s1390, %s1400
          %s1402 = smul.addr %s30, 16
          %s1403 = scalar_lea.hbm %s13, %s1402
          %s1405 = sshll.u32 %s1392, 4
          %s1406 = int_to_ptr.vmem [resolvable:$true] %s1405
          %1408 = dma.vmem_to_hbm [thread:$0]  %s1406, 16, %s1403, %s1390
        $region88: #{tpu_custom_call.1} parent=67 // pred_fallthru
          _
      $region68: #{tpu_custom_call.1} parent=5 // pred_fallthru
        _
      %p1409 = scmp.le.s32.totalorder 2, %s25
      // Predicated region
      $region89: #{tpu_custom_call.1} parent=5 // pred_check
        %p1410 = pneg %p1409
      $region90: #{tpu_custom_call.1} parent=5 // pred_check_branch
        %1412 = sbr.rel (%p1410) target = $region92
      $region91: #{tpu_custom_call.1} parent=5 // pred_region
        %s1413 = ssub.s32 %s25, 2
        // Predicated region
        $region93: #{tpu_custom_call.1} parent=91 // pred_check
          %p1414 = pneg %p316
        $region94: #{tpu_custom_call.1} parent=91 // pred_check_branch
          %1416 = sbr.rel (%p1414) target = $region96
        $region95: #{tpu_custom_call.1} parent=91 // pred_region
          %p1417 = scmp.lt.s32.totalorder %s31, 1
          %s1418 = scalar_select %p1417, %s31, 1
          %s1419 = smul.addr %s1418, 8
          %s1420 = scalar_lea.vmem %s12, %s1419
        $region96: #{tpu_custom_call.1} parent=91 // pred_fallthru
          _
        // Predicated region
        $region97: #{tpu_custom_call.1} parent=91 // pred_check
          %p1421 = pneg %p342
        $region98: #{tpu_custom_call.1} parent=91 // pred_check_branch
          %1423 = sbr.rel (%p1421) target = $region100
        $region99: #{tpu_custom_call.1} parent=91 // pred_region
          %s1424 = sand.u32 %s327, 1
          %s1425 = scalar_lea.sflag [#allocation7], %s1424
          %s1426 = sand.u32 %s327, 1
          %s1427 = scalar_lea.vmem [#allocation11], %s1426
          %1428 = dma.done %s1425, 16
        $region100: #{tpu_custom_call.1} parent=91 // pred_fallthru
          _
      $region92: #{tpu_custom_call.1} parent=5 // pred_fallthru
        _
    $region6: #{tpu_custom_call.1} parent=1 // loop_footer
      %s29 = sadd.s32 1, %s25
    $region7: #{tpu_custom_call.1} parent=1 // loop_footer_branch
      %24 = sbr.rel target = $region3
    $region8: #{tpu_custom_call.1} parent=1 // loop_exit
      _
    %1429 = vsyncpa [#allocation6], 1
    %s1430 = scalar_lea.sflag [#allocation6], 1
    %1431 = vsyncpa %s1430, 1
    %1432 = vsyncpa [#allocation9], 1
    %1433 = vsyncpa [#allocation7], 1
    %s1434 = scalar_lea.sflag [#allocation7], 1
    %1435 = vsyncpa %s1434, 1

</llo_original>
